<compile_context>
chip_gen: v6e
topology: v6e:2x2x1
jax: 0.10.0
libtpu: 0.0.40
codegen_flags: <defaults>
</compile_context>

<pallas_src>
import functools

import jax
import jax.numpy as jnp
from jax.experimental import pallas as pl
from jax.experimental.pallas import tpu as pltpu

EPS = 1e-5


def _generator_kernel(x_ref, w1_ref, gb1_ref, w2_ref, gb2_ref, w3_ref,
                      o_ref, s1_ref, s2_ref, *, inv_count):
    p = pl.program_id(0)
    first = (pl.program_id(1) == 0) & (pl.program_id(2) == 0)
    last = ((pl.program_id(1) == pl.num_programs(1) - 1)
            & (pl.program_id(2) == pl.num_programs(2) - 1))

    # Zero the per-layer stats accumulators at the start of their pass.
    @pl.when((p == 0) & first)
    def _():
        s1_ref[...] = jnp.zeros_like(s1_ref)

    @pl.when((p == 1) & first)
    def _():
        s2_ref[...] = jnp.zeros_like(s2_ref)

    # layer 1: ConvT1d(noise -> C1, k=1)  ==  W1 (C1, Cin) @ x (Cin, tl)
    x = x_ref[0].astype(jnp.bfloat16)                                   # (Cin, tl)
    h1 = jnp.dot(w1_ref[...], x, preferred_element_type=jnp.float32)    # (C1, tl) f32

    # ---- pass 0: accumulate layer-1 batch stats --------------------------------
    @pl.when(p == 0)
    def _():
        s1_ref[:, 0:1] += jnp.sum(h1, axis=1, keepdims=True)
        s1_ref[:, 1:2] += jnp.sum(h1 * h1, axis=1, keepdims=True)

    @pl.when((p == 0) & last)
    def _():  # fold BN1 into per-channel scale/bias (overwrites the stats scratch)
        mean = s1_ref[:, 0:1] * inv_count
        var = s1_ref[:, 1:2] * inv_count - mean * mean
        scale = gb1_ref[:, 0:1] * jax.lax.rsqrt(var + EPS)
        s1_ref[:, 0:1] = scale
        s1_ref[:, 1:2] = gb1_ref[:, 1:2] - mean * scale

    # ---- passes 1/2: BN1 + ReLU + layer 2 (+ pass-2 epilogue) -------------------
    @pl.when(p >= 1)
    def _():
        a1 = jnp.maximum(h1 * s1_ref[:, 0:1] + s1_ref[:, 1:2], 0.0)     # (C1, tl)
        h2 = jnp.dot(w2_ref[...], a1.astype(jnp.bfloat16),
                     preferred_element_type=jnp.float32)                # (C2, tl)

        @pl.when(p == 1)
        def _():
            s2_ref[:, 0:1] += jnp.sum(h2, axis=1, keepdims=True)
            s2_ref[:, 1:2] += jnp.sum(h2 * h2, axis=1, keepdims=True)

        @pl.when((p == 1) & last)
        def _():
            mean = s2_ref[:, 0:1] * inv_count
            var = s2_ref[:, 1:2] * inv_count - mean * mean
            scale = gb2_ref[:, 0:1] * jax.lax.rsqrt(var + EPS)
            s2_ref[:, 0:1] = scale
            s2_ref[:, 1:2] = gb2_ref[:, 1:2] - mean * scale

        @pl.when(p == 2)
        def _():  # BN2 + ReLU + layer 3 + tanh, stored directly in NCL layout
            a2 = jnp.maximum(h2 * s2_ref[:, 0:1] + s2_ref[:, 1:2], 0.0)
            h3 = jnp.dot(w3_ref[...], a2.astype(jnp.bfloat16),
                         preferred_element_type=jnp.float32)            # (C3, tl)
            o_ref[0] = jnp.tanh(h3).astype(o_ref.dtype)


def _pick_l_tile(L):
    # Largest lane-dense tile that divides L; fall back to full L (toy sizes).
    for cand in (512, 256, 128):
        if L % cand == 0:
            return cand
    return L


def generator_forward(x_ncl, params):
    """x_ncl: (N, noise, L) float32 -> (N, 160, L) float32. No layout transposes."""
    N, C_in, L = x_ncl.shape

    # k=1 ConvTranspose1d weights as (C_out, C_in) matrices, bf16 for the MXU.
    w1 = jnp.transpose(params["w1"]).astype(jnp.bfloat16)   # (160, C_in)
    w2 = jnp.transpose(params["w2"]).astype(jnp.bfloat16)   # (128, 160)
    w3 = jnp.transpose(params["w3"]).astype(jnp.bfloat16)   # (160, 128)
    gb1 = jnp.stack([params["g1"], params["b1"]], axis=1).astype(jnp.float32)  # (160, 2)
    gb2 = jnp.stack([params["g2"], params["b2"]], axis=1).astype(jnp.float32)  # (128, 2)

    C1, C2, C3 = w1.shape[0], w2.shape[0], w3.shape[0]
    tl = _pick_l_tile(L)
    n_lt = L // tl
    M = N * L

    kernel = functools.partial(_generator_kernel, inv_count=1.0 / float(M))

    def resident(shape):  # weights / gamma-beta stay VMEM-resident for the whole grid
        return pl.BlockSpec(shape, lambda p, n, l: (0, 0))

    # The output block index only advances during pass 2, so nothing but final
    # data is ever written back to HBM and each tile is written exactly once.
    out_spec = pl.BlockSpec(
        (1, C3, tl),
        lambda p, n, l: (jnp.where(p == 2, n, 0), 0, jnp.where(p == 2, l, 0)))

    flops = 2 * M * (3 * C_in * C1 + 2 * C1 * C2 + C2 * C3)
    bytes_accessed = (3 * M * C_in * 4 + M * C3 * 4
                      + 2 * (w1.size + w2.size + w3.size)
                      + 4 * (gb1.size + gb2.size))

    return pl.pallas_call(
        kernel,
        out_shape=jax.ShapeDtypeStruct((N, C3, L), jnp.float32),
        grid=(3, N, n_lt),
        in_specs=[
            pl.BlockSpec((1, C_in, tl), lambda p, n, l: (n, 0, l)),
            resident(w1.shape), resident(gb1.shape),
            resident(w2.shape), resident(gb2.shape),
            resident(w3.shape),
        ],
        out_specs=out_spec,
        scratch_shapes=[
            pltpu.VMEM((C1, 2), jnp.float32),   # layer-1 [sum, sumsq] -> [scale, bias]
            pltpu.VMEM((C2, 2), jnp.float32),   # layer-2 [sum, sumsq] -> [scale, bias]
        ],
        compiler_params=pltpu.CompilerParams(
            dimension_semantics=("arbitrary", "arbitrary", "arbitrary"),
            vmem_limit_bytes=32 * 1024 * 1024),
        cost_estimate=pl.CostEstimate(
            flops=int(flops),
            transcendentals=int(M * C3),
            bytes_accessed=int(bytes_accessed)),
    )(x_ncl, w1, gb1, w2, gb2, w3)


def init_params(key, noise):
    ks = jax.random.split(key, 7)
    scale = 0.05
    return {
        # ConvTranspose1d weight (in, out, 1) with k=1 == (in, out) matrix
        "w1": scale * jax.random.normal(ks[0], (noise, 160), jnp.float32),
        "g1": 1.0 + 0.1 * jax.random.normal(ks[1], (160,), jnp.float32),
        "b1": 0.1 * jax.random.normal(ks[2], (160,), jnp.float32),
        "w2": scale * jax.random.normal(ks[3], (160, 128), jnp.float32),
        "g2": 1.0 + 0.1 * jax.random.normal(ks[4], (128,), jnp.float32),
        "b2": 0.1 * jax.random.normal(ks[5], (128,), jnp.float32),
        "w3": scale * jax.random.normal(ks[6], (128, 160), jnp.float32),
    }


def reference_forward(x_ncl, p):
    """Pure f32 reference with PyTorch training-mode BatchNorm1d semantics."""
    def bn(h, g, b):  # h: (N, C, L), stats over (N, L), biased variance
        m = jnp.mean(h, axis=(0, 2), keepdims=True)
        v = jnp.mean((h - m) ** 2, axis=(0, 2), keepdims=True)
        return (h - m) / jnp.sqrt(v + EPS) * g[None, :, None] + b[None, :, None]

    conv = lambda h, w: jnp.einsum("nil,io->nol", h, w)
    h = jnp.maximum(bn(conv(x_ncl, p["w1"]), p["g1"], p["b1"]), 0.0)
    h = jnp.maximum(bn(conv(h, p["w2"]), p["g2"], p["b2"]), 0.0)
    return jnp.tanh(conv(h, p["w3"]))


if __name__ == "__main__":
    key = jax.random.PRNGKey(0)
    k_x, k_p = jax.random.split(key)

    N, noise, L = 2, 32, 8          # batch=2, noise channels=32, length=8
    x = jax.random.normal(k_x, (N, noise, L), jnp.float32)
    params = init_params(k_p, noise)

    fwd = jax.jit(generator_forward)
    out = jax.block_until_ready(fwd(x, params))

    ref = reference_forward(x, params)
    assert out.shape == (N, 160, L), out.shape
    # bf16 MXU inputs (f32 accumulation, f32 BN stats/tanh) -> small drift vs f32 ref.
    max_err = float(jnp.max(jnp.abs(out - ref)))
    assert max_err < 5e-2, max_err
    print("KERNEL_OK")
</pallas_src>

<mosaic_0001>
module attributes {stable_mosaic.version = 11 : i64} {
  func.func @_generator_kernel(%arg0: i32, %arg1: i32, %arg2: i32, %arg3: memref<1x32x8xf32, #tpu.memory_space<vmem>>, %arg4: memref<160x32xbf16, #tpu.memory_space<vmem>>, %arg5: memref<160x2xf32, #tpu.memory_space<vmem>>, %arg6: memref<128x160xbf16, #tpu.memory_space<vmem>>, %arg7: memref<128x2xf32, #tpu.memory_space<vmem>>, %arg8: memref<160x128xbf16, #tpu.memory_space<vmem>>, %arg9: memref<1x160x8xf32, #tpu.memory_space<vmem>>, %arg10: memref<160x2xf32, #tpu.memory_space<vmem>>, %arg11: memref<128x2xf32, #tpu.memory_space<vmem>>) attributes {dimension_semantics = [#tpu.dimension_semantics<arbitrary>, #tpu.dimension_semantics<arbitrary>, #tpu.dimension_semantics<arbitrary>], iteration_bounds = array<i64: 3, 2, 1>, scalar_prefetch = 0 : i64, scratch_operands = 2 : i64, tpu.core_type = #tpu.core_type<tc>, window_params = [{transform_indices = @transform_0, window_bounds = array<i64: 1, 32, 8>}, {pipeline_mode = #tpu.pipeline_mode<synchronous>, transform_indices = @transform_1, window_bounds = array<i64: 160, 32>}, {pipeline_mode = #tpu.pipeline_mode<synchronous>, transform_indices = @transform_2, window_bounds = array<i64: 160, 2>}, {pipeline_mode = #tpu.pipeline_mode<synchronous>, transform_indices = @transform_3, window_bounds = array<i64: 128, 160>}, {pipeline_mode = #tpu.pipeline_mode<synchronous>, transform_indices = @transform_4, window_bounds = array<i64: 128, 2>}, {pipeline_mode = #tpu.pipeline_mode<synchronous>, transform_indices = @transform_5, window_bounds = array<i64: 160, 128>}, {transform_indices = @transform_6, window_bounds = array<i64: 1, 160, 8>}]} {
    %c0_i32 = arith.constant 0 : i32
    %0 = arith.cmpi eq, %arg1, %c0_i32 : i32
    %c0_i32_0 = arith.constant 0 : i32
    %1 = arith.cmpi eq, %arg2, %c0_i32_0 : i32
    %2 = arith.andi %0, %1 : i1
    %c1_i32 = arith.constant 1 : i32
    %3 = arith.cmpi eq, %arg1, %c1_i32 : i32
    %c0_i32_1 = arith.constant 0 : i32
    %4 = arith.cmpi eq, %arg2, %c0_i32_1 : i32
    %5 = arith.andi %3, %4 : i1
    %c0_i32_2 = arith.constant 0 : i32
    %6 = arith.cmpi eq, %arg0, %c0_i32_2 : i32
    %7 = arith.andi %6, %2 : i1
    %8 = arith.extui %7 : i1 to i32
    %c0_i32_3 = arith.constant 0 : i32
    %9 = arith.cmpi ne, %8, %c0_i32_3 : i32
    scf.if %9 {
      %cst_16 = arith.constant 0.000000e+00 : f32
      %29 = vector.broadcast %cst_16 : f32 to vector<160x2xf32>
      %c0_17 = arith.constant 0 : index
      %c0_18 = arith.constant 0 : index
      %30 = vector.load %arg10[%c0_17, %c0_18] : memref<160x2xf32, #tpu.memory_space<vmem>>, vector<160x2xf32>
      tpu.vector_store %arg10[%c0_17, %c0_18], %29 {strides = array<i32>} : memref<160x2xf32, #tpu.memory_space<vmem>>, vector<160x2xf32>,
    } else {
    }
    %c1_i32_4 = arith.constant 1 : i32
    %10 = arith.cmpi eq, %arg0, %c1_i32_4 : i32
    %11 = arith.andi %10, %2 : i1
    %12 = arith.extui %11 : i1 to i32
    %c0_i32_5 = arith.constant 0 : i32
    %13 = arith.cmpi ne, %12, %c0_i32_5 : i32
    scf.if %13 {
      %cst_16 = arith.constant 0.000000e+00 : f32
      %29 = vector.broadcast %cst_16 : f32 to vector<128x2xf32>
      %c0_17 = arith.constant 0 : index
      %c0_18 = arith.constant 0 : index
      %30 = vector.load %arg11[%c0_17, %c0_18] : memref<128x2xf32, #tpu.memory_space<vmem>>, vector<128x2xf32>
      tpu.vector_store %arg11[%c0_17, %c0_18], %29 {strides = array<i32>} : memref<128x2xf32, #tpu.memory_space<vmem>>, vector<128x2xf32>,
    } else {
    }
    %c0 = arith.constant 0 : index
    %c0_6 = arith.constant 0 : index
    %c0_7 = arith.constant 0 : index
    %14 = vector.load %arg3[%c0, %c0_6, %c0_7] : memref<1x32x8xf32, #tpu.memory_space<vmem>>, vector<1x32x8xf32>
    %15 = vector.shape_cast %14 : vector<1x32x8xf32> to vector<32x8xf32>
    %16 = arith.truncf %15 : vector<32x8xf32> to vector<32x8xbf16>
    %c0_8 = arith.constant 0 : index
    %c0_9 = arith.constant 0 : index
    %17 = vector.load %arg4[%c0_8, %c0_9] : memref<160x32xbf16, #tpu.memory_space<vmem>>, vector<160x32xbf16>
    %cst = arith.constant dense<0.000000e+00> : vector<160x8xf32>
    %18 = tpu.matmul %17, %16, %cst {dimension_numbers = #tpu.dot_dimension_numbers<[1], [0], [0], [1], [0, 0, 1, 1], [], []>} : vector<160x32xbf16>, vector<32x8xbf16>, vector<160x8xf32> -> vector<160x8xf32>
    %c0_i32_10 = arith.constant 0 : i32
    %19 = arith.cmpi eq, %arg0, %c0_i32_10 : i32
    %20 = arith.extui %19 : i1 to i32
    %c0_i32_11 = arith.constant 0 : i32
    %21 = arith.cmpi ne, %20, %c0_i32_11 : i32
    scf.if %21 {
      %c0_16 = arith.constant 0 : index
      %c0_17 = arith.constant 0 : index
      %29 = vector.load %arg10[%c0_16, %c0_17] : memref<160x2xf32, #tpu.memory_space<vmem>>, vector<160x1xf32>
      %cst_18 = arith.constant dense<0.000000e+00> : vector<160xf32>
      %30 = vector.multi_reduction <add>, %18, %cst_18 [1] : vector<160x8xf32> to vector<160xf32>
      %31 = vector.shape_cast %30 : vector<160xf32> to vector<160x1xf32>
      %32 = arith.addf %29, %31 : vector<160x1xf32>
      %c0_19 = arith.constant 0 : index
      %c0_20 = arith.constant 0 : index
      %33 = vector.load %arg10[%c0_19, %c0_20] : memref<160x2xf32, #tpu.memory_space<vmem>>, vector<160x1xf32>
      tpu.vector_store %arg10[%c0_19, %c0_20], %32 {strides = array<i32>} : memref<160x2xf32, #tpu.memory_space<vmem>>, vector<160x1xf32>,
      %c0_21 = arith.constant 0 : index
      %c1 = arith.constant 1 : index
      %34 = vector.load %arg10[%c0_21, %c1] : memref<160x2xf32, #tpu.memory_space<vmem>>, vector<160x1xf32>
      %35 = arith.mulf %18, %18 : vector<160x8xf32>
      %cst_22 = arith.constant dense<0.000000e+00> : vector<160xf32>
      %36 = vector.multi_reduction <add>, %35, %cst_22 [1] : vector<160x8xf32> to vector<160xf32>
      %37 = vector.shape_cast %36 : vector<160xf32> to vector<160x1xf32>
      %38 = arith.addf %34, %37 : vector<160x1xf32>
      %c0_23 = arith.constant 0 : index
      %c1_24 = arith.constant 1 : index
      %39 = vector.load %arg10[%c0_23, %c1_24] : memref<160x2xf32, #tpu.memory_space<vmem>>, vector<160x1xf32>
      tpu.vector_store %arg10[%c0_23, %c1_24], %38 {strides = array<i32>} : memref<160x2xf32, #tpu.memory_space<vmem>>, vector<160x1xf32>,
    } else {
    }
    %c0_i32_12 = arith.constant 0 : i32
    %22 = arith.cmpi eq, %arg0, %c0_i32_12 : i32
    %23 = arith.andi %22, %5 : i1
    %24 = arith.extui %23 : i1 to i32
    %c0_i32_13 = arith.constant 0 : i32
    %25 = arith.cmpi ne, %24, %c0_i32_13 : i32
    scf.if %25 {
      %c0_16 = arith.constant 0 : index
      %c0_17 = arith.constant 0 : index
      %29 = vector.load %arg10[%c0_16, %c0_17] : memref<160x2xf32, #tpu.memory_space<vmem>>, vector<160x1xf32>
      %cst_18 = arith.constant 6.250000e-02 : f32
      %30 = vector.broadcast %cst_18 : f32 to vector<160x1xf32>
      %31 = arith.mulf %29, %30 : vector<160x1xf32>
      %c0_19 = arith.constant 0 : index
      %c1 = arith.constant 1 : index
      %32 = vector.load %arg10[%c0_19, %c1] : memref<160x2xf32, #tpu.memory_space<vmem>>, vector<160x1xf32>
      %cst_20 = arith.constant 6.250000e-02 : f32
      %33 = vector.broadcast %cst_20 : f32 to vector<160x1xf32>
      %34 = arith.mulf %32, %33 : vector<160x1xf32>
      %35 = arith.mulf %31, %31 : vector<160x1xf32>
      %36 = arith.subf %34, %35 : vector<160x1xf32>
      %c0_21 = arith.constant 0 : index
      %c0_22 = arith.constant 0 : index
      %37 = vector.load %arg5[%c0_21, %c0_22] : memref<160x2xf32, #tpu.memory_space<vmem>>, vector<160x1xf32>
      %cst_23 = arith.constant 9.99999974E-6 : f32
      %38 = vector.broadcast %cst_23 : f32 to vector<160x1xf32>
      %39 = arith.addf %36, %38 : vector<160x1xf32>
      %40 = math.rsqrt %39 : vector<160x1xf32>
      %41 = arith.mulf %37, %40 : vector<160x1xf32>
      %c0_24 = arith.constant 0 : index
      %c0_25 = arith.constant 0 : index
      %42 = vector.load %arg10[%c0_24, %c0_25] : memref<160x2xf32, #tpu.memory_space<vmem>>, vector<160x1xf32>
      tpu.vector_store %arg10[%c0_24, %c0_25], %41 {strides = array<i32>} : memref<160x2xf32, #tpu.memory_space<vmem>>, vector<160x1xf32>,
      %c0_26 = arith.constant 0 : index
      %c1_27 = arith.constant 1 : index
      %43 = vector.load %arg5[%c0_26, %c1_27] : memref<160x2xf32, #tpu.memory_space<vmem>>, vector<160x1xf32>
      %44 = arith.mulf %31, %41 : vector<160x1xf32>
      %45 = arith.subf %43, %44 : vector<160x1xf32>
      %c0_28 = arith.constant 0 : index
      %c1_29 = arith.constant 1 : index
      %46 = vector.load %arg10[%c0_28, %c1_29] : memref<160x2xf32, #tpu.memory_space<vmem>>, vector<160x1xf32>
      tpu.vector_store %arg10[%c0_28, %c1_29], %45 {strides = array<i32>} : memref<160x2xf32, #tpu.memory_space<vmem>>, vector<160x1xf32>,
    } else {
    }
    %c1_i32_14 = arith.constant 1 : i32
    %26 = arith.cmpi sge, %arg0, %c1_i32_14 : i32
    %27 = arith.extui %26 : i1 to i32
    %c0_i32_15 = arith.constant 0 : i32
    %28 = arith.cmpi ne, %27, %c0_i32_15 : i32
    scf.if %28 {
      %c0_16 = arith.constant 0 : index
      %c0_17 = arith.constant 0 : index
      %29 = vector.load %arg10[%c0_16, %c0_17] : memref<160x2xf32, #tpu.memory_space<vmem>>, vector<160x1xf32>
      %30 = vector.broadcast %29 : vector<160x1xf32> to vector<160x8xf32>
      %31 = arith.mulf %18, %30 : vector<160x8xf32>
      %c0_18 = arith.constant 0 : index
      %c1 = arith.constant 1 : index
      %32 = vector.load %arg10[%c0_18, %c1] : memref<160x2xf32, #tpu.memory_space<vmem>>, vector<160x1xf32>
      %33 = vector.broadcast %32 : vector<160x1xf32> to vector<160x8xf32>
      %34 = arith.addf %31, %33 : vector<160x8xf32>
      %cst_19 = arith.constant 0.000000e+00 : f32
      %35 = vector.broadcast %cst_19 : f32 to vector<160x8xf32>
      %36 = arith.maximumf %34, %35 : vector<160x8xf32>
      %c0_20 = arith.constant 0 : index
      %c0_21 = arith.constant 0 : index
      %37 = vector.load %arg6[%c0_20, %c0_21] : memref<128x160xbf16, #tpu.memory_space<vmem>>, vector<128x160xbf16>
      %38 = arith.truncf %36 : vector<160x8xf32> to vector<160x8xbf16>
      %cst_22 = arith.constant dense<0.000000e+00> : vector<128x8xf32>
      %39 = tpu.matmul %37, %38, %cst_22 {dimension_numbers = #tpu.dot_dimension_numbers<[1], [0], [0], [1], [0, 0, 1, 1], [], []>} : vector<128x160xbf16>, vector<160x8xbf16>, vector<128x8xf32> -> vector<128x8xf32>
      %c1_i32_23 = arith.constant 1 : i32
      %40 = arith.cmpi eq, %arg0, %c1_i32_23 : i32
      %41 = arith.extui %40 : i1 to i32
      %c0_i32_24 = arith.constant 0 : i32
      %42 = arith.cmpi ne, %41, %c0_i32_24 : i32
      scf.if %42 {
        %c0_28 = arith.constant 0 : index
        %c0_29 = arith.constant 0 : index
        %50 = vector.load %arg11[%c0_28, %c0_29] : memref<128x2xf32, #tpu.memory_space<vmem>>, vector<128x1xf32>
        %cst_30 = arith.constant dense<0.000000e+00> : vector<128xf32>
        %51 = vector.multi_reduction <add>, %39, %cst_30 [1] : vector<128x8xf32> to vector<128xf32>
        %52 = vector.shape_cast %51 : vector<128xf32> to vector<128x1xf32>
        %53 = arith.addf %50, %52 : vector<128x1xf32>
        %c0_31 = arith.constant 0 : index
        %c0_32 = arith.constant 0 : index
        %54 = vector.load %arg11[%c0_31, %c0_32] : memref<128x2xf32, #tpu.memory_space<vmem>>, vector<128x1xf32>
        tpu.vector_store %arg11[%c0_31, %c0_32], %53 {strides = array<i32>} : memref<128x2xf32, #tpu.memory_space<vmem>>, vector<128x1xf32>,
        %c0_33 = arith.constant 0 : index
        %c1_34 = arith.constant 1 : index
        %55 = vector.load %arg11[%c0_33, %c1_34] : memref<128x2xf32, #tpu.memory_space<vmem>>, vector<128x1xf32>
        %56 = arith.mulf %39, %39 : vector<128x8xf32>
        %cst_35 = arith.constant dense<0.000000e+00> : vector<128xf32>
        %57 = vector.multi_reduction <add>, %56, %cst_35 [1] : vector<128x8xf32> to vector<128xf32>
        %58 = vector.shape_cast %57 : vector<128xf32> to vector<128x1xf32>
        %59 = arith.addf %55, %58 : vector<128x1xf32>
        %c0_36 = arith.constant 0 : index
        %c1_37 = arith.constant 1 : index
        %60 = vector.load %arg11[%c0_36, %c1_37] : memref<128x2xf32, #tpu.memory_space<vmem>>, vector<128x1xf32>
        tpu.vector_store %arg11[%c0_36, %c1_37], %59 {strides = array<i32>} : memref<128x2xf32, #tpu.memory_space<vmem>>, vector<128x1xf32>,
      } else {
      }
      %c1_i32_25 = arith.constant 1 : i32
      %43 = arith.cmpi eq, %arg0, %c1_i32_25 : i32
      %44 = arith.andi %43, %5 : i1
      %45 = arith.extui %44 : i1 to i32
      %c0_i32_26 = arith.constant 0 : i32
      %46 = arith.cmpi ne, %45, %c0_i32_26 : i32
      scf.if %46 {
        %c0_28 = arith.constant 0 : index
        %c0_29 = arith.constant 0 : index
        %50 = vector.load %arg11[%c0_28, %c0_29] : memref<128x2xf32, #tpu.memory_space<vmem>>, vector<128x1xf32>
        %cst_30 = arith.constant 6.250000e-02 : f32
        %51 = vector.broadcast %cst_30 : f32 to vector<128x1xf32>
        %52 = arith.mulf %50, %51 : vector<128x1xf32>
        %c0_31 = arith.constant 0 : index
        %c1_32 = arith.constant 1 : index
        %53 = vector.load %arg11[%c0_31, %c1_32] : memref<128x2xf32, #tpu.memory_space<vmem>>, vector<128x1xf32>
        %cst_33 = arith.constant 6.250000e-02 : f32
        %54 = vector.broadcast %cst_33 : f32 to vector<128x1xf32>
        %55 = arith.mulf %53, %54 : vector<128x1xf32>
        %56 = arith.mulf %52, %52 : vector<128x1xf32>
        %57 = arith.subf %55, %56 : vector<128x1xf32>
        %c0_34 = arith.constant 0 : index
        %c0_35 = arith.constant 0 : index
        %58 = vector.load %arg7[%c0_34, %c0_35] : memref<128x2xf32, #tpu.memory_space<vmem>>, vector<128x1xf32>
        %cst_36 = arith.constant 9.99999974E-6 : f32
        %59 = vector.broadcast %cst_36 : f32 to vector<128x1xf32>
        %60 = arith.addf %57, %59 : vector<128x1xf32>
        %61 = math.rsqrt %60 : vector<128x1xf32>
        %62 = arith.mulf %58, %61 : vector<128x1xf32>
        %c0_37 = arith.constant 0 : index
        %c0_38 = arith.constant 0 : index
        %63 = vector.load %arg11[%c0_37, %c0_38] : memref<128x2xf32, #tpu.memory_space<vmem>>, vector<128x1xf32>
        tpu.vector_store %arg11[%c0_37, %c0_38], %62 {strides = array<i32>} : memref<128x2xf32, #tpu.memory_space<vmem>>, vector<128x1xf32>,
        %c0_39 = arith.constant 0 : index
        %c1_40 = arith.constant 1 : index
        %64 = vector.load %arg7[%c0_39, %c1_40] : memref<128x2xf32, #tpu.memory_space<vmem>>, vector<128x1xf32>
        %65 = arith.mulf %52, %62 : vector<128x1xf32>
        %66 = arith.subf %64, %65 : vector<128x1xf32>
        %c0_41 = arith.constant 0 : index
        %c1_42 = arith.constant 1 : index
        %67 = vector.load %arg11[%c0_41, %c1_42] : memref<128x2xf32, #tpu.memory_space<vmem>>, vector<128x1xf32>
        tpu.vector_store %arg11[%c0_41, %c1_42], %66 {strides = array<i32>} : memref<128x2xf32, #tpu.memory_space<vmem>>, vector<128x1xf32>,
      } else {
      }
      %c2_i32 = arith.constant 2 : i32
      %47 = arith.cmpi eq, %arg0, %c2_i32 : i32
      %48 = arith.extui %47 : i1 to i32
      %c0_i32_27 = arith.constant 0 : i32
      %49 = arith.cmpi ne, %48, %c0_i32_27 : i32
      scf.if %49 {
        %c0_28 = arith.constant 0 : index
        %c0_29 = arith.constant 0 : index
        %50 = vector.load %arg11[%c0_28, %c0_29] : memref<128x2xf32, #tpu.memory_space<vmem>>, vector<128x1xf32>
        %51 = vector.broadcast %50 : vector<128x1xf32> to vector<128x8xf32>
        %52 = arith.mulf %39, %51 : vector<128x8xf32>
        %c0_30 = arith.constant 0 : index
        %c1_31 = arith.constant 1 : index
        %53 = vector.load %arg11[%c0_30, %c1_31] : memref<128x2xf32, #tpu.memory_space<vmem>>, vector<128x1xf32>
        %54 = vector.broadcast %53 : vector<128x1xf32> to vector<128x8xf32>
        %55 = arith.addf %52, %54 : vector<128x8xf32>
        %cst_32 = arith.constant 0.000000e+00 : f32
        %56 = vector.broadcast %cst_32 : f32 to vector<128x8xf32>
        %57 = arith.maximumf %55, %56 : vector<128x8xf32>
        %c0_33 = arith.constant 0 : index
        %c0_34 = arith.constant 0 : index
        %58 = vector.load %arg8[%c0_33, %c0_34] : memref<160x128xbf16, #tpu.memory_space<vmem>>, vector<160x128xbf16>
        %59 = arith.truncf %57 : vector<128x8xf32> to vector<128x8xbf16>
        %cst_35 = arith.constant dense<0.000000e+00> : vector<160x8xf32>
        %60 = tpu.matmul %58, %59, %cst_35 {dimension_numbers = #tpu.dot_dimension_numbers<[1], [0], [0], [1], [0, 0, 1, 1], [], []>} : vector<160x128xbf16>, vector<128x8xbf16>, vector<160x8xf32> -> vector<160x8xf32>
        %61 = math.tanh %60 : vector<160x8xf32>
        %c0_36 = arith.constant 0 : index
        %c0_37 = arith.constant 0 : index
        %c0_38 = arith.constant 0 : index
        %62 = vector.load %arg9[%c0_36, %c0_37, %c0_38] : memref<1x160x8xf32, #tpu.memory_space<vmem>>, vector<1x160x8xf32>
        %63 = vector.shape_cast %62 : vector<1x160x8xf32> to vector<160x8xf32>
        %64 = vector.shape_cast %61 : vector<160x8xf32> to vector<1x160x8xf32>
        tpu.vector_store %arg9[%c0_36, %c0_37, %c0_38], %64 {strides = array<i32>} : memref<1x160x8xf32, #tpu.memory_space<vmem>>, vector<1x160x8xf32>,
      } else {
      }
    } else {
    }
    return
  }
  func.func @transform_0(%arg0: i32, %arg1: i32, %arg2: i32) -> (i32, i32, i32) {
    %c0_i32 = arith.constant 0 : i32
    %c0_i32_0 = arith.constant 0 : i32
    return %arg1, %c0_i32, %arg2 : i32, i32, i32
  }
  func.func @transform_1(%arg0: i32, %arg1: i32, %arg2: i32) -> (i32, i32) {
    %c0_i32 = arith.constant 0 : i32
    %c0_i32_0 = arith.constant 0 : i32
    %c0_i32_1 = arith.constant 0 : i32
    return %c0_i32, %c0_i32_0 : i32, i32
  }
  func.func @transform_2(%arg0: i32, %arg1: i32, %arg2: i32) -> (i32, i32) {
    %c0_i32 = arith.constant 0 : i32
    %c0_i32_0 = arith.constant 0 : i32
    %c0_i32_1 = arith.constant 0 : i32
    return %c0_i32, %c0_i32_0 : i32, i32
  }
  func.func @transform_3(%arg0: i32, %arg1: i32, %arg2: i32) -> (i32, i32) {
    %c0_i32 = arith.constant 0 : i32
    %c0_i32_0 = arith.constant 0 : i32
    %c0_i32_1 = arith.constant 0 : i32
    return %c0_i32, %c0_i32_0 : i32, i32
  }
  func.func @transform_4(%arg0: i32, %arg1: i32, %arg2: i32) -> (i32, i32) {
    %c0_i32 = arith.constant 0 : i32
    %c0_i32_0 = arith.constant 0 : i32
    %c0_i32_1 = arith.constant 0 : i32
    return %c0_i32, %c0_i32_0 : i32, i32
  }
  func.func @transform_5(%arg0: i32, %arg1: i32, %arg2: i32) -> (i32, i32) {
    %c0_i32 = arith.constant 0 : i32
    %c0_i32_0 = arith.constant 0 : i32
    %c0_i32_1 = arith.constant 0 : i32
    return %c0_i32, %c0_i32_0 : i32, i32
  }
  func.func @transform_6(%arg0: i32, %arg1: i32, %arg2: i32) -> (i32, i32, i32) {
    %c2_i32 = arith.constant 2 : i32
    %0 = arith.cmpi eq, %arg0, %c2_i32 : i32
    %c0_i32 = arith.constant 0 : i32
    %1 = arith.select %0, %arg1, %c0_i32 : i32
    %c2_i32_0 = arith.constant 2 : i32
    %2 = arith.cmpi eq, %arg0, %c2_i32_0 : i32
    %c0_i32_1 = arith.constant 0 : i32
    %3 = arith.select %2, %arg2, %c0_i32_1 : i32
    %c0_i32_2 = arith.constant 0 : i32
    %c0_i32_3 = arith.constant 0 : i32
    return %1, %c0_i32_2, %3 : i32, i32, i32
  }
}

</mosaic_0001>

<llo_original>
// kernel: generator_forward.1
$region0: #{generator_forward.1}
  #allocation0 [shape = 'u32[]', space=smem, size = 0x4, offset = 0x4, fixed_abs, tag = 'smem constant byte address 0x4 - core index']
  #allocation1 [shape = 'u32[144,128]{1,0:T(1,128)}', space=vmem, size = 0x12000, scoped, tag = 'internal scratch']
  #allocation2 [shape = 'f32[160,2]{1,0:T(8,128)}', space=vmem, size = 0x14000, scoped, tag = 'scratch operand']
  #allocation3 [shape = 'f32[128,2]{1,0:T(8,128)}', space=vmem, size = 0x10000, scoped, tag = 'scratch operand']
  %s0 = inlined_call_operand.vmem [shape: f32[2,32,8], index: 0, kind: input, shape index: {}]
  %s1 = inlined_call_operand.vmem [shape: bf16[160,32], index: 1, kind: input, shape index: {}]
  %s2 = inlined_call_operand.vmem [shape: f32[160,2], index: 2, kind: input, shape index: {}]
  %s3 = inlined_call_operand.vmem [shape: bf16[128,160], index: 3, kind: input, shape index: {}]
  %s4 = inlined_call_operand.vmem [shape: f32[128,2], index: 4, kind: input, shape index: {}]
  %s5 = inlined_call_operand.vmem [shape: bf16[160,128], index: 5, kind: input, shape index: {}]
  %s6 = inlined_call_operand.vmem [shape: f32[2,160,8], index: 6, kind: output, shape index: {}]
  %s7 = sld [smem:[#allocation0]]
  $region89: #{generator_forward.1} parent=0
    _
  %s9 = ssub.s32 1, %s7
  %s10 = scalar_select 0, %s9, %s7
  loop: start=0, step=1, limit=8
  $region2: #{generator_forward.1} parent=0 // loop_pre_header
    _
  $region3: #{generator_forward.1} parent=0 // loop_header
    %s12 = sphi 0, %s16
    %p13 = scmp.ge.s32.totalorder %s12, 8
    %s19 = sphi 0, %s38
    %s20 = sphi 0, %s34
    %s21 = sphi 0, %s30
    %s22 = sphi 0, %s19
    %s23 = sphi 0, %s20
    %s24 = sphi 0, %s21
    %s25 = sphi 0, %s22
    %s26 = sphi 0, %s23
    %s27 = sphi 0, %s24
    %s43 = sphi 0, %s45
    %s46 = sphi 0, %s43
    %s47 = sphi 0, %s46
    %s63 = sphi 0, %s47
    %s67 = sphi 0, %s67
    %s69 = sphi 0, %s67
    %s70 = sphi 0, %s69
    %s84 = sphi 0, %s70
    %s88 = sphi 0, %s88
    %s90 = sphi 0, %s88
    %s91 = sphi 0, %s90
    %s105 = sphi 0, %s91
    %s109 = sphi 0, %s109
    %s111 = sphi 0, %s109
    %s112 = sphi 0, %s111
    %s126 = sphi 0, %s112
    %s130 = sphi 0, %s130
    %s132 = sphi 0, %s130
    %s133 = sphi 0, %s132
    %s147 = sphi 0, %s133
    %s151 = sphi 0, %s151
    %s153 = sphi 0, %s151
    %s154 = sphi 0, %s153
    %s168 = sphi 0, %s154
    %s182 = sphi 0, %s184
    %s185 = sphi 0, %s182
    %s186 = sphi 0, %s185
    %s202 = sphi 0, %s186
  $region4: #{generator_forward.1} parent=0 // loop_header_branch
    %15 = sbr.rel (%p13) target = $region8
  $region5: #{generator_forward.1} parent=0 // loop_body
    %s17 = ssub.s32 %s12, 1
    %s18 = ssub.s32 %s12, 2
    %s28 = sadd.s32 1, %s21
    %p29 = scmp.ge.s32.totalorder %s28, 1
    %s30 = scalar_select %p29, 0, %s28
    %s31 = sadd.s32 1, %s20
    %s32 = scalar_select %p29, %s31, %s20
    %p33 = scmp.ge.s32.totalorder %s32, 2
    %s34 = scalar_select %p33, 0, %s32
    %s35 = sadd.s32 1, %s19
    %s36 = scalar_select %p33, %s35, %s19
    %p37 = scmp.ge.s32.totalorder %s36, 3
    %s38 = scalar_select %p37, 0, %s36
    %s39 = ssub.s32 %s20, %s34
    %s40 = ssub.s32 %s21, %s30
    %s41 = sor.u32 %s39, %s40
    %p42 = scmp.eq.s32.totalorder %s41, 0
    %s44 = sadd.s32 %s43, 1
    %s45 = scalar_select %p42, %s43, %s44
    %p48 = pneg %p42
    %p49 = scmp.eq.s32.totalorder %s12, 5
    %p50 = por %p48, %p49
    %p51 = scmp.ne.s32.totalorder %s43, %s46
    %p52 = scmp.eq.s32.totalorder %s12, 0
    %p53 = por %p51, %p52
    %p54 = scmp.ne.s32.totalorder %s43, %s46
    %p55 = scmp.eq.s32.totalorder %s17, 5
    %p56 = por %p54, %p55
    %p57 = scmp.ne.s32.totalorder %s46, %s47
    %p58 = scmp.eq.s32.totalorder %s17, 0
    %p59 = por %p57, %p58
    %p60 = scmp.ne.s32.totalorder %s46, %s47
    %p61 = scmp.eq.s32.totalorder %s18, 5
    %p62 = por %p60, %p61
    %p64 = scmp.ne.s32.totalorder %s47, %s63
    %p65 = scmp.eq.s32.totalorder %s18, 0
    %p66 = por %p64, %p65
    %s68 = sadd.s32 %s67, 1
    %p71 = scmp.eq.s32.totalorder %s12, 5
    %p72 = scmp.ne.s32.totalorder %s67, %s69
    %p73 = scmp.eq.s32.totalorder %s12, 0
    %p74 = por %p72, %p73
    %p75 = scmp.ne.s32.totalorder %s67, %s69
    %p76 = scmp.eq.s32.totalorder %s17, 5
    %p77 = por %p75, %p76
    %p78 = scmp.ne.s32.totalorder %s69, %s70
    %p79 = scmp.eq.s32.totalorder %s17, 0
    %p80 = por %p78, %p79
    %p81 = scmp.ne.s32.totalorder %s69, %s70
    %p82 = scmp.eq.s32.totalorder %s18, 5
    %p83 = por %p81, %p82
    %p85 = scmp.ne.s32.totalorder %s70, %s84
    %p86 = scmp.eq.s32.totalorder %s18, 0
    %p87 = por %p85, %p86
    %s89 = sadd.s32 %s88, 1
    %p92 = scmp.eq.s32.totalorder %s12, 5
    %p93 = scmp.ne.s32.totalorder %s88, %s90
    %p94 = scmp.eq.s32.totalorder %s12, 0
    %p95 = por %p93, %p94
    %p96 = scmp.ne.s32.totalorder %s88, %s90
    %p97 = scmp.eq.s32.totalorder %s17, 5
    %p98 = por %p96, %p97
    %p99 = scmp.ne.s32.totalorder %s90, %s91
    %p100 = scmp.eq.s32.totalorder %s17, 0
    %p101 = por %p99, %p100
    %p102 = scmp.ne.s32.totalorder %s90, %s91
    %p103 = scmp.eq.s32.totalorder %s18, 5
    %p104 = por %p102, %p103
    %p106 = scmp.ne.s32.totalorder %s91, %s105
    %p107 = scmp.eq.s32.totalorder %s18, 0
    %p108 = por %p106, %p107
    %s110 = sadd.s32 %s109, 1
    %p113 = scmp.eq.s32.totalorder %s12, 5
    %p114 = scmp.ne.s32.totalorder %s109, %s111
    %p115 = scmp.eq.s32.totalorder %s12, 0
    %p116 = por %p114, %p115
    %p117 = scmp.ne.s32.totalorder %s109, %s111
    %p118 = scmp.eq.s32.totalorder %s17, 5
    %p119 = por %p117, %p118
    %p120 = scmp.ne.s32.totalorder %s111, %s112
    %p121 = scmp.eq.s32.totalorder %s17, 0
    %p122 = por %p120, %p121
    %p123 = scmp.ne.s32.totalorder %s111, %s112
    %p124 = scmp.eq.s32.totalorder %s18, 5
    %p125 = por %p123, %p124
    %p127 = scmp.ne.s32.totalorder %s112, %s126
    %p128 = scmp.eq.s32.totalorder %s18, 0
    %p129 = por %p127, %p128
    %s131 = sadd.s32 %s130, 1
    %p134 = scmp.eq.s32.totalorder %s12, 5
    %p135 = scmp.ne.s32.totalorder %s130, %s132
    %p136 = scmp.eq.s32.totalorder %s12, 0
    %p137 = por %p135, %p136
    %p138 = scmp.ne.s32.totalorder %s130, %s132
    %p139 = scmp.eq.s32.totalorder %s17, 5
    %p140 = por %p138, %p139
    %p141 = scmp.ne.s32.totalorder %s132, %s133
    %p142 = scmp.eq.s32.totalorder %s17, 0
    %p143 = por %p141, %p142
    %p144 = scmp.ne.s32.totalorder %s132, %s133
    %p145 = scmp.eq.s32.totalorder %s18, 5
    %p146 = por %p144, %p145
    %p148 = scmp.ne.s32.totalorder %s133, %s147
    %p149 = scmp.eq.s32.totalorder %s18, 0
    %p150 = por %p148, %p149
    %s152 = sadd.s32 %s151, 1
    %p155 = scmp.eq.s32.totalorder %s12, 5
    %p156 = scmp.ne.s32.totalorder %s151, %s153
    %p157 = scmp.eq.s32.totalorder %s12, 0
    %p158 = por %p156, %p157
    %p159 = scmp.ne.s32.totalorder %s151, %s153
    %p160 = scmp.eq.s32.totalorder %s17, 5
    %p161 = por %p159, %p160
    %p162 = scmp.ne.s32.totalorder %s153, %s154
    %p163 = scmp.eq.s32.totalorder %s17, 0
    %p164 = por %p162, %p163
    %p165 = scmp.ne.s32.totalorder %s153, %s154
    %p166 = scmp.eq.s32.totalorder %s18, 5
    %p167 = por %p165, %p166
    %p169 = scmp.ne.s32.totalorder %s154, %s168
    %p170 = scmp.eq.s32.totalorder %s18, 0
    %p171 = por %p169, %p170
    %p172 = scmp.eq.s32.totalorder %s19, 2
    %s173 = scalar_select %p172, %s20, 0
    %s174 = scalar_select %p172, %s21, 0
    %p175 = scmp.eq.s32.totalorder %s38, 2
    %s176 = scalar_select %p175, %s34, 0
    %s177 = scalar_select %p175, %s30, 0
    %s178 = ssub.s32 %s173, %s176
    %s179 = ssub.s32 %s174, %s177
    %s180 = sor.u32 %s178, %s179
    %p181 = scmp.eq.s32.totalorder %s180, 0
    %s183 = sadd.s32 %s182, 1
    %s184 = scalar_select %p181, %s182, %s183
    %p187 = pneg %p181
    %p188 = scmp.eq.s32.totalorder %s12, 5
    %p189 = por %p187, %p188
    %p190 = scmp.ne.s32.totalorder %s182, %s185
    %p191 = scmp.eq.s32.totalorder %s12, 0
    %p192 = por %p190, %p191
    %p193 = scmp.ne.s32.totalorder %s182, %s185
    %p194 = scmp.eq.s32.totalorder %s17, 5
    %p195 = por %p193, %p194
    %p196 = scmp.ne.s32.totalorder %s185, %s186
    %p197 = scmp.eq.s32.totalorder %s17, 0
    %p198 = por %p196, %p197
    %p199 = scmp.ne.s32.totalorder %s185, %s186
    %p200 = scmp.eq.s32.totalorder %s18, 5
    %p201 = por %p199, %p200
    %p203 = scmp.ne.s32.totalorder %s186, %s202
    %p204 = scmp.eq.s32.totalorder %s18, 0
    %p205 = por %p203, %p204
    %p206 = scmp.le.s32.totalorder 1, %s12
    %p207 = scmp.lt.s32.totalorder %s12, 7
    %p208 = pnand %p206, %p207
    %p209 = pneg %p208
    // Predicated region
    $region9: #{generator_forward.1} parent=5 // pred_check
      _
    $region10: #{generator_forward.1} parent=5 // pred_check_branch
      %211 = sbr.rel (%p208) target = $region12
    $region11: #{generator_forward.1} parent=5 // pred_region
      %s212 = ssub.s32 %s12, 1
      // Predicated region
      $region13: #{generator_forward.1} parent=11 // pred_check
        %p213 = pneg %p80
      $region14: #{generator_forward.1} parent=11 // pred_check_branch
        %215 = sbr.rel (%p213) target = $region16
      $region15: #{generator_forward.1} parent=11 // pred_region
        _
      $region16: #{generator_forward.1} parent=11 // pred_fallthru
        _
      // Predicated region
      $region17: #{generator_forward.1} parent=11 // pred_check
        %p216 = pneg %p101
      $region18: #{generator_forward.1} parent=11 // pred_check_branch
        %218 = sbr.rel (%p216) target = $region20
      $region19: #{generator_forward.1} parent=11 // pred_region
        _
      $region20: #{generator_forward.1} parent=11 // pred_fallthru
        _
      // Predicated region
      $region21: #{generator_forward.1} parent=11 // pred_check
        %p219 = pneg %p122
      $region22: #{generator_forward.1} parent=11 // pred_check_branch
        %221 = sbr.rel (%p219) target = $region24
      $region23: #{generator_forward.1} parent=11 // pred_region
        _
      $region24: #{generator_forward.1} parent=11 // pred_fallthru
        _
      // Predicated region
      $region25: #{generator_forward.1} parent=11 // pred_check
        %p222 = pneg %p143
      $region26: #{generator_forward.1} parent=11 // pred_check_branch
        %224 = sbr.rel (%p222) target = $region28
      $region27: #{generator_forward.1} parent=11 // pred_region
        _
      $region28: #{generator_forward.1} parent=11 // pred_fallthru
        _
      // Predicated region
      $region29: #{generator_forward.1} parent=11 // pred_check
        %p225 = pneg %p164
      $region30: #{generator_forward.1} parent=11 // pred_check_branch
        %227 = sbr.rel (%p225) target = $region32
      $region31: #{generator_forward.1} parent=11 // pred_region
        _
      $region32: #{generator_forward.1} parent=11 // pred_fallthru
        _
    $region12: #{generator_forward.1} parent=5 // pred_fallthru
      _
    %p228 = scmp.lt.s32.totalorder %s12, 6
    // Predicated region
    $region33: #{generator_forward.1} parent=5 // pred_check
      %p229 = pneg %p228
    $region34: #{generator_forward.1} parent=5 // pred_check_branch
      %231 = sbr.rel (%p229) target = $region36
    $region35: #{generator_forward.1} parent=5 // pred_region
      // Predicated region
      $region37: #{generator_forward.1} parent=35 // pred_check
        %p232 = pneg %p53
      $region38: #{generator_forward.1} parent=35 // pred_check_branch
        %234 = sbr.rel (%p232) target = $region40
      $region39: #{generator_forward.1} parent=35 // pred_region
        %p235 = scmp.lt.s32.totalorder %s20, 1
        %s236 = scalar_select %p235, %s20, 1
        %p237 = scmp.lt.s32.totalorder %s21, 0
        %s238 = scalar_select %p237, %s21, 0
        %s239 = smul.addr %s236, 4
        %s240 = sadd.s32 %s238, %s239
        %s241 = smul.addr %s240, 8
        %s242 = scalar_lea.vmem %s0, %s241
      $region40: #{generator_forward.1} parent=35 // pred_fallthru
        _
    $region36: #{generator_forward.1} parent=5 // pred_fallthru
      _
    %p243 = scmp.le.s32.totalorder 1, %s12
    %p244 = scmp.lt.s32.totalorder %s12, 7
    %p245 = pnand %p243, %p244
    %p246 = pneg %p245
    // Predicated region
    $region41: #{generator_forward.1} parent=5 // pred_check
      _
    $region42: #{generator_forward.1} parent=5 // pred_check_branch
      %248 = sbr.rel (%p245) target = $region44
    $region43: #{generator_forward.1} parent=5 // pred_region
      %s249 = ssub.s32 %s12, 1
      %p250 = scmp.lt.s32.totalorder %s23, 1
      %s251 = scalar_select %p250, %s23, 1
      %p252 = scmp.lt.s32.totalorder %s24, 0
      %s253 = scalar_select %p252, %s24, 0
      %s254 = smul.addr %s251, 4
      %s255 = sadd.s32 %s253, %s254
      %s256 = smul.addr %s255, 8
      %s257 = scalar_lea.vmem %s0, %s256
      %p258 = pneg %p59
      %p259 = pneg %p56
      %p260 = pneg %p80
      %p261 = pneg %p77
      %p262 = pneg %p101
      %p263 = pneg %p98
      %p264 = pneg %p122
      %p265 = pneg %p119
      %p266 = pneg %p143
      %p267 = pneg %p140
      %p268 = pneg %p164
      %p269 = pneg %p161
      %p270 = pneg %p198
      %p271 = pneg %p195
      %p272 = scmp.eq.s32.totalorder %s22, 2
      %s273 = scalar_select %p272, %s23, 0
      %s274 = scalar_select %p272, %s24, 0
      %p275 = scmp.lt.s32.totalorder %s273, 1
      %s276 = scalar_select %p275, %s273, 1
      %p277 = scmp.lt.s32.totalorder %s274, 0
      %s278 = scalar_select %p277, %s274, 0
      %s279 = smul.addr %s276, 20
      %s280 = sadd.s32 %s278, %s279
      %s281 = smul.addr %s280, 8
      %s282 = scalar_lea.vmem %s6, %s281
      %p283 = scmp.lt.s32.totalorder %s23, 1
      %s284 = scalar_select %p283, %s23, 1
      %p285 = scmp.lt.s32.totalorder %s24, 0
      %s286 = scalar_select %p285, %s24, 0
      %s287 = smul.addr %s284, 4
      %s288 = sadd.s32 %s286, %s287
      %s289 = smul.addr %s288, 8
      %s290 = scalar_lea.vmem %s0, %s289
      %p291 = scmp.eq.s32.totalorder %s22, 2
      %s292 = scalar_select %p291, %s23, 0
      %s293 = scalar_select %p291, %s24, 0
      %p294 = scmp.lt.s32.totalorder %s292, 1
      %s295 = scalar_select %p294, %s292, 1
      %p296 = scmp.lt.s32.totalorder %s293, 0
      %s297 = scalar_select %p296, %s293, 0
      %s298 = smul.addr %s295, 20
      %s299 = sadd.s32 %s297, %s298
      %s300 = smul.addr %s299, 8
      %s301 = scalar_lea.vmem %s6, %s300
      %p302 = scmp.eq.s32.totalorder %s22, 2
      %s303 = scalar_select %p302, %s23, 0
      %s304 = scalar_select %p302, %s24, 0
      %p306 = scmp.eq.s32.totalorder %s23, 0
      %p307 = scmp.eq.s32.totalorder %s24, 0
      %p308 = pnand %p306, %p307
      %p309 = pneg %p308
      %p310 = scmp.eq.s32.totalorder %s23, 1
      %p311 = pnand %p310, %p307
      %p312 = pneg %p311
      %p313 = scmp.eq.s32.totalorder %s22, 0
      %p314 = pnand %p313, %p309
      %p315 = pneg %p314
      // Predicated region
      $region45: #{generator_forward.1} parent=43 // pred_check
        _
      $region46: #{generator_forward.1} parent=43 // pred_check_branch
        %317 = sbr.rel (%p314) target = $region48
      $region47: #{generator_forward.1} parent=43 // pred_region
        %vm318 = vcmask 15360
        %319 = vst.msk [vmem:[#allocation2] sm:$0xff] %vm318, 0.0
        %320 = vst.msk [vmem:[#allocation2 + $0x8] sm:$0xff] %vm318, 0.0
        %321 = vst.msk [vmem:[#allocation2 + $0x10] sm:$0xff] %vm318, 0.0
        %322 = vst.msk [vmem:[#allocation2 + $0x18] sm:$0xff] %vm318, 0.0
        %323 = vst.msk [vmem:[#allocation2 + $0x20] sm:$0xff] %vm318, 0.0
        %324 = vst.msk [vmem:[#allocation2 + $0x28] sm:$0xff] %vm318, 0.0
        %325 = vst.msk [vmem:[#allocation2 + $0x30] sm:$0xff] %vm318, 0.0
        %326 = vst.msk [vmem:[#allocation2 + $0x38] sm:$0xff] %vm318, 0.0
        %327 = vst.msk [vmem:[#allocation2 + $0x40] sm:$0xff] %vm318, 0.0
        %328 = vst.msk [vmem:[#allocation2 + $0x48] sm:$0xff] %vm318, 0.0
        %329 = vst.msk [vmem:[#allocation2 + $0x50] sm:$0xff] %vm318, 0.0
        %330 = vst.msk [vmem:[#allocation2 + $0x58] sm:$0xff] %vm318, 0.0
        %331 = vst.msk [vmem:[#allocation2 + $0x60] sm:$0xff] %vm318, 0.0
        %332 = vst.msk [vmem:[#allocation2 + $0x68] sm:$0xff] %vm318, 0.0
        %333 = vst.msk [vmem:[#allocation2 + $0x70] sm:$0xff] %vm318, 0.0
        %334 = vst.msk [vmem:[#allocation2 + $0x78] sm:$0xff] %vm318, 0.0
        %335 = vst.msk [vmem:[#allocation2 + $0x80] sm:$0xff] %vm318, 0.0
        %336 = vst.msk [vmem:[#allocation2 + $0x88] sm:$0xff] %vm318, 0.0
        %337 = vst.msk [vmem:[#allocation2 + $0x90] sm:$0xff] %vm318, 0.0
        %338 = vst.msk [vmem:[#allocation2 + $0x98] sm:$0xff] %vm318, 0.0
      $region48: #{generator_forward.1} parent=43 // pred_fallthru
        _
      %p339 = scmp.eq.s32.totalorder %s22, 1
      %p340 = pnand %p339, %p309
      %p341 = pneg %p340
      // Predicated region
      $region49: #{generator_forward.1} parent=43 // pred_check
        _
      $region50: #{generator_forward.1} parent=43 // pred_check_branch
        %343 = sbr.rel (%p340) target = $region52
      $region51: #{generator_forward.1} parent=43 // pred_region
        %vm344 = vcmask 15360
        %345 = vst.msk [vmem:[#allocation3] sm:$0xff] %vm344, 0.0
        %346 = vst.msk [vmem:[#allocation3 + $0x8] sm:$0xff] %vm344, 0.0
        %347 = vst.msk [vmem:[#allocation3 + $0x10] sm:$0xff] %vm344, 0.0
        %348 = vst.msk [vmem:[#allocation3 + $0x18] sm:$0xff] %vm344, 0.0
        %349 = vst.msk [vmem:[#allocation3 + $0x20] sm:$0xff] %vm344, 0.0
        %350 = vst.msk [vmem:[#allocation3 + $0x28] sm:$0xff] %vm344, 0.0
        %351 = vst.msk [vmem:[#allocation3 + $0x30] sm:$0xff] %vm344, 0.0
        %352 = vst.msk [vmem:[#allocation3 + $0x38] sm:$0xff] %vm344, 0.0
        %353 = vst.msk [vmem:[#allocation3 + $0x40] sm:$0xff] %vm344, 0.0
        %354 = vst.msk [vmem:[#allocation3 + $0x48] sm:$0xff] %vm344, 0.0
        %355 = vst.msk [vmem:[#allocation3 + $0x50] sm:$0xff] %vm344, 0.0
        %356 = vst.msk [vmem:[#allocation3 + $0x58] sm:$0xff] %vm344, 0.0
        %357 = vst.msk [vmem:[#allocation3 + $0x60] sm:$0xff] %vm344, 0.0
        %358 = vst.msk [vmem:[#allocation3 + $0x68] sm:$0xff] %vm344, 0.0
        %359 = vst.msk [vmem:[#allocation3 + $0x70] sm:$0xff] %vm344, 0.0
        %360 = vst.msk [vmem:[#allocation3 + $0x78] sm:$0xff] %vm344, 0.0
      $region52: #{generator_forward.1} parent=43 // pred_fallthru
        _
      %v361 = vld [vmem:[%s290] sm:$0xff]
      %v362 = vld [vmem:[%s290 + $0x8] sm:$0xff]
      %v363 = vld [vmem:[%s290 + $0x10] sm:$0xff]
      %v364 = vld [vmem:[%s290 + $0x18] sm:$0xff]
      %v365 = vpack.c.bf16 %v362, %v361
      %v366 = vpack.c.bf16 %v364, %v363
      %v367 = vld [vmem:[%s1] sm:$0xf]
      %v368 = vld [vmem:[%s1 + $0x4] sm:$0xf]
      %v369 = vld [vmem:[%s1 + $0x8] sm:$0xf]
      %v370 = vld [vmem:[%s1 + $0xc] sm:$0xf]
      %v371 = vld [vmem:[%s1 + $0x10] sm:$0xf]
      %v372 = vld [vmem:[%s1 + $0x14] sm:$0xf]
      %v373 = vld [vmem:[%s1 + $0x18] sm:$0xf]
      %v374 = vld [vmem:[%s1 + $0x1c] sm:$0xf]
      %v375 = vld [vmem:[%s1 + $0x20] sm:$0xf]
      %v376 = vld [vmem:[%s1 + $0x24] sm:$0xf]
      %v377 = vld [vmem:[%s1 + $0x28] sm:$0xf]
      %v378 = vld [vmem:[%s1 + $0x2c] sm:$0xf]
      %v379 = vld [vmem:[%s1 + $0x30] sm:$0xf]
      %v380 = vld [vmem:[%s1 + $0x34] sm:$0xf]
      %v381 = vld [vmem:[%s1 + $0x38] sm:$0xf]
      %v382 = vld [vmem:[%s1 + $0x3c] sm:$0xf]
      %v383 = vld [vmem:[%s1 + $0x40] sm:$0xf]
      %v384 = vld [vmem:[%s1 + $0x44] sm:$0xf]
      %v385 = vld [vmem:[%s1 + $0x48] sm:$0xf]
      %v386 = vld [vmem:[%s1 + $0x4c] sm:$0xf]
      %v407 = vunpack.c.l.b16 %v367
      %v408 = vunpack.c.l.b16 %v368
      %v409 = vunpack.c.l.b16 %v369
      %v410 = vunpack.c.l.b16 %v370
      %v411 = vunpack.c.l.b16 %v371
      %v412 = vunpack.c.l.b16 %v372
      %v413 = vunpack.c.l.b16 %v373
      %v414 = vunpack.c.l.b16 %v374
      %v415 = vunpack.c.l.b16 %v375
      %v416 = vunpack.c.l.b16 %v376
      %v417 = vunpack.c.l.b16 %v377
      %v418 = vunpack.c.l.b16 %v378
      %v419 = vunpack.c.l.b16 %v379
      %v420 = vunpack.c.l.b16 %v380
      %v421 = vunpack.c.l.b16 %v381
      %v422 = vunpack.c.l.b16 %v382
      %v423 = vunpack.c.l.b16 %v383
      %v424 = vunpack.c.l.b16 %v384
      %v425 = vunpack.c.l.b16 %v385
      %v426 = vunpack.c.l.b16 %v386
      %v427 = vpack.c.b16 %v408, %v407
      %v428 = vpack.c.b16 %v410, %v409
      %v429 = vpack.c.b16 %v412, %v411
      %v430 = vpack.c.b16 %v414, %v413
      %v431 = vpack.c.b16 %v416, %v415
      %v432 = vpack.c.b16 %v418, %v417
      %v433 = vpack.c.b16 %v420, %v419
      %v434 = vpack.c.b16 %v422, %v421
      %v435 = vpack.c.b16 %v424, %v423
      %v436 = vpack.c.b16 %v426, %v425
      %vm437 = vcmask 261120
      %v439 = vsel %vm437, %v427, 0
      %v442 = vsel %vm437, %v428, 0
      %v445 = vsel %vm437, %v429, 0
      %v448 = vsel %vm437, %v430, 0
      %v451 = vsel %vm437, %v431, 0
      %v454 = vsel %vm437, %v432, 0
      %v457 = vsel %vm437, %v433, 0
      %v460 = vsel %vm437, %v434, 0
      %v463 = vsel %vm437, %v435, 0
      %v466 = vsel %vm437, %v436, 0
      %468 = vmatprep.subr.bf16.mxu0 0
      %469 = vmatpush1.bf16.msra.mxu0 0
      %470 = vmatprep.subr.bf16.mxu0 0
      %471 = vmatpush1.bf16.msra.mxu0 0
      %472 = vmatprep.subr.bf16.mxu0 0
      %473 = vmatpush1.bf16.msra.mxu0 0
      %474 = vmatprep.subr.bf16.mxu0 0
      %475 = vmatpush1.bf16.msra.mxu0 0
      %476 = vmatprep.subr.bf16.mxu0 0
      %477 = vmatpush1.bf16.msra.mxu0 0
      %478 = vmatprep.subr.bf16.mxu0 0
      %479 = vmatpush1.bf16.msra.mxu0 0
      %480 = vmatprep.subr.bf16.mxu0 0
      %481 = vmatpush1.bf16.msra.mxu0 %v366
      %482 = vmatprep.subr.bf16.mxu0 0
      %483 = vmatpush1.bf16.msra.mxu0 %v365
      %484 = vmatprep.subr.bf16.mxu0 0
      %485 = vmatpush2.bf16.msra.mxu0 0
      %486 = vmatprep.subr.bf16.mxu0 0
      %487 = vmatpush2.bf16.msra.mxu0 0
      %488 = vmatprep.subr.bf16.mxu0 0
      %489 = vmatpush2.bf16.msra.mxu0 0
      %490 = vmatprep.subr.bf16.mxu0 0
      %491 = vmatpush2.bf16.msra.mxu0 0
      %492 = vmatprep.subr.bf16.mxu0 0
      %493 = vmatpush2.bf16.msra.mxu0 0
      %494 = vmatprep.subr.bf16.mxu0 0
      %495 = vmatpush2.bf16.msra.mxu0 0
      %496 = vmatprep.subr.bf16.mxu0 0
      %497 = vmatpush2.bf16.msra.mxu0 0
      %498 = vmatprep.subr.bf16.mxu0 0
      %499 = vmatpush2.bf16.msra.mxu0 0
      %500 = vmatprep.mubr.bf16.mxu0 0
      %501 = vmatmul.mubr.bf16.gmra.mxu0 %v439
      %v502 = vpop.f32.mrf.mxu0
      %v503 = vadd.f32 0.0, %v502
      %v504 = vpop.f32.mrf.mxu0
      %v505 = vpop.f32.mrf.mxu0
      %v506 = vadd.f32 0.0, %v505
      %v507 = vpop.f32.mrf.mxu0
      %508 = vmatprep.mubr.bf16.mxu0 0
      %509 = vmatmul.mubr.bf16.gmra.mxu0 %v442
      %v510 = vpop.f32.mrf.mxu0
      %v511 = vadd.f32 0.0, %v510
      %v512 = vpop.f32.mrf.mxu0
      %v513 = vpop.f32.mrf.mxu0
      %v514 = vadd.f32 0.0, %v513
      %v515 = vpop.f32.mrf.mxu0
      %516 = vmatprep.mubr.bf16.mxu0 0
      %517 = vmatmul.mubr.bf16.gmra.mxu0 %v445
      %v518 = vpop.f32.mrf.mxu0
      %v519 = vadd.f32 0.0, %v518
      %v520 = vpop.f32.mrf.mxu0
      %v521 = vpop.f32.mrf.mxu0
      %v522 = vadd.f32 0.0, %v521
      %v523 = vpop.f32.mrf.mxu0
      %524 = vmatprep.mubr.bf16.mxu0 0
      %525 = vmatmul.mubr.bf16.gmra.mxu0 %v448
      %v526 = vpop.f32.mrf.mxu0
      %v527 = vadd.f32 0.0, %v526
      %v528 = vpop.f32.mrf.mxu0
      %v529 = vpop.f32.mrf.mxu0
      %v530 = vadd.f32 0.0, %v529
      %v531 = vpop.f32.mrf.mxu0
      %532 = vmatprep.mubr.bf16.mxu0 0
      %533 = vmatmul.mubr.bf16.gmra.mxu0 %v451
      %v534 = vpop.f32.mrf.mxu0
      %v535 = vadd.f32 0.0, %v534
      %v536 = vpop.f32.mrf.mxu0
      %v537 = vpop.f32.mrf.mxu0
      %v538 = vadd.f32 0.0, %v537
      %v539 = vpop.f32.mrf.mxu0
      %540 = vmatprep.mubr.bf16.mxu0 0
      %541 = vmatmul.mubr.bf16.gmra.mxu0 %v454
      %v542 = vpop.f32.mrf.mxu0
      %v543 = vadd.f32 0.0, %v542
      %v544 = vpop.f32.mrf.mxu0
      %v545 = vpop.f32.mrf.mxu0
      %v546 = vadd.f32 0.0, %v545
      %v547 = vpop.f32.mrf.mxu0
      %548 = vmatprep.mubr.bf16.mxu0 0
      %549 = vmatmul.mubr.bf16.gmra.mxu0 %v457
      %v550 = vpop.f32.mrf.mxu0
      %v551 = vadd.f32 0.0, %v550
      %v552 = vpop.f32.mrf.mxu0
      %v553 = vpop.f32.mrf.mxu0
      %v554 = vadd.f32 0.0, %v553
      %v555 = vpop.f32.mrf.mxu0
      %556 = vmatprep.mubr.bf16.mxu0 0
      %557 = vmatmul.mubr.bf16.gmra.mxu0 %v460
      %v558 = vpop.f32.mrf.mxu0
      %v559 = vadd.f32 0.0, %v558
      %v560 = vpop.f32.mrf.mxu0
      %v561 = vpop.f32.mrf.mxu0
      %v562 = vadd.f32 0.0, %v561
      %v563 = vpop.f32.mrf.mxu0
      %564 = vmatprep.mubr.bf16.mxu0 0
      %565 = vmatmul.mubr.bf16.gmra.mxu0 %v463
      %v566 = vpop.f32.mrf.mxu0
      %v567 = vadd.f32 0.0, %v566
      %v568 = vpop.f32.mrf.mxu0
      %v569 = vpop.f32.mrf.mxu0
      %v570 = vadd.f32 0.0, %v569
      %v571 = vpop.f32.mrf.mxu0
      %572 = vmatprep.mubr.bf16.mxu0 0
      %573 = vmatmul.mubr.bf16.gmra.mxu0 %v466
      %v574 = vpop.f32.mrf.mxu0
      %v575 = vadd.f32 0.0, %v574
      %v576 = vpop.f32.mrf.mxu0
      %v577 = vpop.f32.mrf.mxu0
      %v578 = vadd.f32 0.0, %v577
      %v579 = vpop.f32.mrf.mxu0
      %580 = vdwg.mxu0
      // Predicated region
      $region53: #{generator_forward.1} parent=43 // pred_check
        %p581 = pneg %p313
      $region54: #{generator_forward.1} parent=43 // pred_check_branch
        %583 = sbr.rel (%p581) target = $region56
      $region55: #{generator_forward.1} parent=43 // pred_region
        %v584 = vld [vmem:[#allocation2] sm:$0xff]
        %v585 = vld [vmem:[#allocation2 + $0x8] sm:$0xff]
        %v586 = vld [vmem:[#allocation2 + $0x10] sm:$0xff]
        %v587 = vld [vmem:[#allocation2 + $0x18] sm:$0xff]
        %v588 = vld [vmem:[#allocation2 + $0x20] sm:$0xff]
        %v589 = vld [vmem:[#allocation2 + $0x28] sm:$0xff]
        %v590 = vld [vmem:[#allocation2 + $0x30] sm:$0xff]
        %v591 = vld [vmem:[#allocation2 + $0x38] sm:$0xff]
        %v592 = vld [vmem:[#allocation2 + $0x40] sm:$0xff]
        %v593 = vld [vmem:[#allocation2 + $0x48] sm:$0xff]
        %v594 = vld [vmem:[#allocation2 + $0x50] sm:$0xff]
        %v595 = vld [vmem:[#allocation2 + $0x58] sm:$0xff]
        %v596 = vld [vmem:[#allocation2 + $0x60] sm:$0xff]
        %v597 = vld [vmem:[#allocation2 + $0x68] sm:$0xff]
        %v598 = vld [vmem:[#allocation2 + $0x70] sm:$0xff]
        %v599 = vld [vmem:[#allocation2 + $0x78] sm:$0xff]
        %v600 = vld [vmem:[#allocation2 + $0x80] sm:$0xff]
        %v601 = vld [vmem:[#allocation2 + $0x88] sm:$0xff]
        %v602 = vld [vmem:[#allocation2 + $0x90] sm:$0xff]
        %v603 = vld [vmem:[#allocation2 + $0x98] sm:$0xff]
        %vm604 = vcmask 64512
        %v605 = vsel %vm604, %v503, 0.0
        %606 = vadd.xlane.f32.xlu0 %v605
        %v607 = vpop.xlane.xlu0 %606
        %v608 = vsel %vm604, %v506, 0.0
        %609 = vadd.xlane.f32.xlu0 %v608
        %v610 = vpop.xlane.xlu0 %609
        %v611 = vsel %vm604, %v511, 0.0
        %612 = vadd.xlane.f32.xlu0 %v611
        %v613 = vpop.xlane.xlu0 %612
        %v614 = vsel %vm604, %v514, 0.0
        %615 = vadd.xlane.f32.xlu0 %v614
        %v616 = vpop.xlane.xlu0 %615
        %v617 = vsel %vm604, %v519, 0.0
        %618 = vadd.xlane.f32.xlu0 %v617
        %v619 = vpop.xlane.xlu0 %618
        %v620 = vsel %vm604, %v522, 0.0
        %621 = vadd.xlane.f32.xlu0 %v620
        %v622 = vpop.xlane.xlu0 %621
        %v623 = vsel %vm604, %v527, 0.0
        %624 = vadd.xlane.f32.xlu0 %v623
        %v625 = vpop.xlane.xlu0 %624
        %v626 = vsel %vm604, %v530, 0.0
        %627 = vadd.xlane.f32.xlu0 %v626
        %v628 = vpop.xlane.xlu0 %627
        %v629 = vsel %vm604, %v535, 0.0
        %630 = vadd.xlane.f32.xlu0 %v629
        %v631 = vpop.xlane.xlu0 %630
        %v632 = vsel %vm604, %v538, 0.0
        %633 = vadd.xlane.f32.xlu0 %v632
        %v634 = vpop.xlane.xlu0 %633
        %v635 = vsel %vm604, %v543, 0.0
        %636 = vadd.xlane.f32.xlu0 %v635
        %v637 = vpop.xlane.xlu0 %636
        %v638 = vsel %vm604, %v546, 0.0
        %639 = vadd.xlane.f32.xlu0 %v638
        %v640 = vpop.xlane.xlu0 %639
        %v641 = vsel %vm604, %v551, 0.0
        %642 = vadd.xlane.f32.xlu0 %v641
        %v643 = vpop.xlane.xlu0 %642
        %v644 = vsel %vm604, %v554, 0.0
        %645 = vadd.xlane.f32.xlu0 %v644
        %v646 = vpop.xlane.xlu0 %645
        %v647 = vsel %vm604, %v559, 0.0
        %648 = vadd.xlane.f32.xlu0 %v647
        %v649 = vpop.xlane.xlu0 %648
        %v650 = vsel %vm604, %v562, 0.0
        %651 = vadd.xlane.f32.xlu0 %v650
        %v652 = vpop.xlane.xlu0 %651
        %v653 = vsel %vm604, %v567, 0.0
        %654 = vadd.xlane.f32.xlu0 %v653
        %v655 = vpop.xlane.xlu0 %654
        %v656 = vsel %vm604, %v570, 0.0
        %657 = vadd.xlane.f32.xlu0 %v656
        %v658 = vpop.xlane.xlu0 %657
        %v659 = vsel %vm604, %v575, 0.0
        %660 = vadd.xlane.f32.xlu0 %v659
        %v661 = vpop.xlane.xlu0 %660
        %v662 = vsel %vm604, %v578, 0.0
        %663 = vadd.xlane.f32.xlu0 %v662
        %v664 = vpop.xlane.xlu0 %663
        %v665 = vadd.f32 %v584, %v607
        %v666 = vadd.f32 %v585, %v610
        %v667 = vadd.f32 %v586, %v613
        %v668 = vadd.f32 %v587, %v616
        %v669 = vadd.f32 %v588, %v619
        %v670 = vadd.f32 %v589, %v622
        %v671 = vadd.f32 %v590, %v625
        %v672 = vadd.f32 %v591, %v628
        %v673 = vadd.f32 %v592, %v631
        %v674 = vadd.f32 %v593, %v634
        %v675 = vadd.f32 %v594, %v637
        %v676 = vadd.f32 %v595, %v640
        %v677 = vadd.f32 %v596, %v643
        %v678 = vadd.f32 %v597, %v646
        %v679 = vadd.f32 %v598, %v649
        %v680 = vadd.f32 %v599, %v652
        %v681 = vadd.f32 %v600, %v655
        %v682 = vadd.f32 %v601, %v658
        %v683 = vadd.f32 %v602, %v661
        %v684 = vadd.f32 %v603, %v664
        %vm685 = vcmask 7168
        %686 = vst.msk [vmem:[#allocation2] sm:$0xff] %vm685, %v665
        %687 = vst.msk [vmem:[#allocation2 + $0x8] sm:$0xff] %vm685, %v666
        %688 = vst.msk [vmem:[#allocation2 + $0x10] sm:$0xff] %vm685, %v667
        %689 = vst.msk [vmem:[#allocation2 + $0x18] sm:$0xff] %vm685, %v668
        %690 = vst.msk [vmem:[#allocation2 + $0x20] sm:$0xff] %vm685, %v669
        %691 = vst.msk [vmem:[#allocation2 + $0x28] sm:$0xff] %vm685, %v670
        %692 = vst.msk [vmem:[#allocation2 + $0x30] sm:$0xff] %vm685, %v671
        %693 = vst.msk [vmem:[#allocation2 + $0x38] sm:$0xff] %vm685, %v672
        %694 = vst.msk [vmem:[#allocation2 + $0x40] sm:$0xff] %vm685, %v673
        %695 = vst.msk [vmem:[#allocation2 + $0x48] sm:$0xff] %vm685, %v674
        %696 = vst.msk [vmem:[#allocation2 + $0x50] sm:$0xff] %vm685, %v675
        %697 = vst.msk [vmem:[#allocation2 + $0x58] sm:$0xff] %vm685, %v676
        %698 = vst.msk [vmem:[#allocation2 + $0x60] sm:$0xff] %vm685, %v677
        %699 = vst.msk [vmem:[#allocation2 + $0x68] sm:$0xff] %vm685, %v678
        %700 = vst.msk [vmem:[#allocation2 + $0x70] sm:$0xff] %vm685, %v679
        %701 = vst.msk [vmem:[#allocation2 + $0x78] sm:$0xff] %vm685, %v680
        %702 = vst.msk [vmem:[#allocation2 + $0x80] sm:$0xff] %vm685, %v681
        %703 = vst.msk [vmem:[#allocation2 + $0x88] sm:$0xff] %vm685, %v682
        %704 = vst.msk [vmem:[#allocation2 + $0x90] sm:$0xff] %vm685, %v683
        %705 = vst.msk [vmem:[#allocation2 + $0x98] sm:$0xff] %vm685, %v684
        %v706 = vld [vmem:[#allocation2] sm:$0xff]
        %v707 = vld [vmem:[#allocation2 + $0x8] sm:$0xff]
        %v708 = vld [vmem:[#allocation2 + $0x10] sm:$0xff]
        %v709 = vld [vmem:[#allocation2 + $0x18] sm:$0xff]
        %v710 = vld [vmem:[#allocation2 + $0x20] sm:$0xff]
        %v711 = vld [vmem:[#allocation2 + $0x28] sm:$0xff]
        %v712 = vld [vmem:[#allocation2 + $0x30] sm:$0xff]
        %v713 = vld [vmem:[#allocation2 + $0x38] sm:$0xff]
        %v714 = vld [vmem:[#allocation2 + $0x40] sm:$0xff]
        %v715 = vld [vmem:[#allocation2 + $0x48] sm:$0xff]
        %v716 = vld [vmem:[#allocation2 + $0x50] sm:$0xff]
        %v717 = vld [vmem:[#allocation2 + $0x58] sm:$0xff]
        %v718 = vld [vmem:[#allocation2 + $0x60] sm:$0xff]
        %v719 = vld [vmem:[#allocation2 + $0x68] sm:$0xff]
        %v720 = vld [vmem:[#allocation2 + $0x70] sm:$0xff]
        %v721 = vld [vmem:[#allocation2 + $0x78] sm:$0xff]
        %v722 = vld [vmem:[#allocation2 + $0x80] sm:$0xff]
        %v723 = vld [vmem:[#allocation2 + $0x88] sm:$0xff]
        %v724 = vld [vmem:[#allocation2 + $0x90] sm:$0xff]
        %v725 = vld [vmem:[#allocation2 + $0x98] sm:$0xff]
        %v726 = vmul.f32 %v503, %v503
        %v727 = vmul.f32 %v506, %v506
        %v728 = vmul.f32 %v511, %v511
        %v729 = vmul.f32 %v514, %v514
        %v730 = vmul.f32 %v519, %v519
        %v731 = vmul.f32 %v522, %v522
        %v732 = vmul.f32 %v527, %v527
        %v733 = vmul.f32 %v530, %v530
        %v734 = vmul.f32 %v535, %v535
        %v735 = vmul.f32 %v538, %v538
        %v736 = vmul.f32 %v543, %v543
        %v737 = vmul.f32 %v546, %v546
        %v738 = vmul.f32 %v551, %v551
        %v739 = vmul.f32 %v554, %v554
        %v740 = vmul.f32 %v559, %v559
        %v741 = vmul.f32 %v562, %v562
        %v742 = vmul.f32 %v567, %v567
        %v743 = vmul.f32 %v570, %v570
        %v744 = vmul.f32 %v575, %v575
        %v745 = vmul.f32 %v578, %v578
        %v746 = vsel %vm604, %v726, 0.0
        %747 = vadd.xlane.f32.xlu0 %v746
        %v748 = vpop.xlane.xlu0 %747
        %v749 = vsel %vm604, %v727, 0.0
        %750 = vadd.xlane.f32.xlu0 %v749
        %v751 = vpop.xlane.xlu0 %750
        %v752 = vsel %vm604, %v728, 0.0
        %753 = vadd.xlane.f32.xlu0 %v752
        %v754 = vpop.xlane.xlu0 %753
        %v755 = vsel %vm604, %v729, 0.0
        %756 = vadd.xlane.f32.xlu0 %v755
        %v757 = vpop.xlane.xlu0 %756
        %v758 = vsel %vm604, %v730, 0.0
        %759 = vadd.xlane.f32.xlu0 %v758
        %v760 = vpop.xlane.xlu0 %759
        %v761 = vsel %vm604, %v731, 0.0
        %762 = vadd.xlane.f32.xlu0 %v761
        %v763 = vpop.xlane.xlu0 %762
        %v764 = vsel %vm604, %v732, 0.0
        %765 = vadd.xlane.f32.xlu0 %v764
        %v766 = vpop.xlane.xlu0 %765
        %v767 = vsel %vm604, %v733, 0.0
        %768 = vadd.xlane.f32.xlu0 %v767
        %v769 = vpop.xlane.xlu0 %768
        %v770 = vsel %vm604, %v734, 0.0
        %771 = vadd.xlane.f32.xlu0 %v770
        %v772 = vpop.xlane.xlu0 %771
        %v773 = vsel %vm604, %v735, 0.0
        %774 = vadd.xlane.f32.xlu0 %v773
        %v775 = vpop.xlane.xlu0 %774
        %v776 = vsel %vm604, %v736, 0.0
        %777 = vadd.xlane.f32.xlu0 %v776
        %v778 = vpop.xlane.xlu0 %777
        %v779 = vsel %vm604, %v737, 0.0
        %780 = vadd.xlane.f32.xlu0 %v779
        %v781 = vpop.xlane.xlu0 %780
        %v782 = vsel %vm604, %v738, 0.0
        %783 = vadd.xlane.f32.xlu0 %v782
        %v784 = vpop.xlane.xlu0 %783
        %v785 = vsel %vm604, %v739, 0.0
        %786 = vadd.xlane.f32.xlu0 %v785
        %v787 = vpop.xlane.xlu0 %786
        %v788 = vsel %vm604, %v740, 0.0
        %789 = vadd.xlane.f32.xlu0 %v788
        %v790 = vpop.xlane.xlu0 %789
        %v791 = vsel %vm604, %v741, 0.0
        %792 = vadd.xlane.f32.xlu0 %v791
        %v793 = vpop.xlane.xlu0 %792
        %v794 = vsel %vm604, %v742, 0.0
        %795 = vadd.xlane.f32.xlu0 %v794
        %v796 = vpop.xlane.xlu0 %795
        %v797 = vsel %vm604, %v743, 0.0
        %798 = vadd.xlane.f32.xlu0 %v797
        %v799 = vpop.xlane.xlu0 %798
        %v800 = vsel %vm604, %v744, 0.0
        %801 = vadd.xlane.f32.xlu0 %v800
        %v802 = vpop.xlane.xlu0 %801
        %v803 = vsel %vm604, %v745, 0.0
        %804 = vadd.xlane.f32.xlu0 %v803
        %v805 = vpop.xlane.xlu0 %804
        %v806 = vadd.f32 %v706, %v748
        %v807 = vadd.f32 %v707, %v751
        %v808 = vadd.f32 %v708, %v754
        %v809 = vadd.f32 %v709, %v757
        %v810 = vadd.f32 %v710, %v760
        %v811 = vadd.f32 %v711, %v763
        %v812 = vadd.f32 %v712, %v766
        %v813 = vadd.f32 %v713, %v769
        %v814 = vadd.f32 %v714, %v772
        %v815 = vadd.f32 %v715, %v775
        %v816 = vadd.f32 %v716, %v778
        %v817 = vadd.f32 %v717, %v781
        %v818 = vadd.f32 %v718, %v784
        %v819 = vadd.f32 %v719, %v787
        %v820 = vadd.f32 %v720, %v790
        %v821 = vadd.f32 %v721, %v793
        %v822 = vadd.f32 %v722, %v796
        %v823 = vadd.f32 %v723, %v799
        %v824 = vadd.f32 %v724, %v802
        %v825 = vadd.f32 %v725, %v805
        %vm826 = vcmask 15368
        %827 = vst.msk [vmem:[#allocation2] sm:$0xff] %vm826, %v806
        %828 = vst.msk [vmem:[#allocation2 + $0x8] sm:$0xff] %vm826, %v807
        %829 = vst.msk [vmem:[#allocation2 + $0x10] sm:$0xff] %vm826, %v808
        %830 = vst.msk [vmem:[#allocation2 + $0x18] sm:$0xff] %vm826, %v809
        %831 = vst.msk [vmem:[#allocation2 + $0x20] sm:$0xff] %vm826, %v810
        %832 = vst.msk [vmem:[#allocation2 + $0x28] sm:$0xff] %vm826, %v811
        %833 = vst.msk [vmem:[#allocation2 + $0x30] sm:$0xff] %vm826, %v812
        %834 = vst.msk [vmem:[#allocation2 + $0x38] sm:$0xff] %vm826, %v813
        %835 = vst.msk [vmem:[#allocation2 + $0x40] sm:$0xff] %vm826, %v814
        %836 = vst.msk [vmem:[#allocation2 + $0x48] sm:$0xff] %vm826, %v815
        %837 = vst.msk [vmem:[#allocation2 + $0x50] sm:$0xff] %vm826, %v816
        %838 = vst.msk [vmem:[#allocation2 + $0x58] sm:$0xff] %vm826, %v817
        %839 = vst.msk [vmem:[#allocation2 + $0x60] sm:$0xff] %vm826, %v818
        %840 = vst.msk [vmem:[#allocation2 + $0x68] sm:$0xff] %vm826, %v819
        %841 = vst.msk [vmem:[#allocation2 + $0x70] sm:$0xff] %vm826, %v820
        %842 = vst.msk [vmem:[#allocation2 + $0x78] sm:$0xff] %vm826, %v821
        %843 = vst.msk [vmem:[#allocation2 + $0x80] sm:$0xff] %vm826, %v822
        %844 = vst.msk [vmem:[#allocation2 + $0x88] sm:$0xff] %vm826, %v823
        %845 = vst.msk [vmem:[#allocation2 + $0x90] sm:$0xff] %vm826, %v824
        %846 = vst.msk [vmem:[#allocation2 + $0x98] sm:$0xff] %vm826, %v825
      $region56: #{generator_forward.1} parent=43 // pred_fallthru
        _
      %p847 = pnand %p313, %p312
      %p848 = pneg %p847
      // Predicated region
      $region57: #{generator_forward.1} parent=43 // pred_check
        _
      $region58: #{generator_forward.1} parent=43 // pred_check_branch
        %850 = sbr.rel (%p847) target = $region60
      $region59: #{generator_forward.1} parent=43 // pred_region
        %v851 = vld [vmem:[#allocation2] sm:$0xff]
        %v852 = vld [vmem:[#allocation2 + $0x8] sm:$0xff]
        %v853 = vld [vmem:[#allocation2 + $0x10] sm:$0xff]
        %v854 = vld [vmem:[#allocation2 + $0x18] sm:$0xff]
        %v855 = vld [vmem:[#allocation2 + $0x20] sm:$0xff]
        %v856 = vld [vmem:[#allocation2 + $0x28] sm:$0xff]
        %v857 = vld [vmem:[#allocation2 + $0x30] sm:$0xff]
        %v858 = vld [vmem:[#allocation2 + $0x38] sm:$0xff]
        %v859 = vld [vmem:[#allocation2 + $0x40] sm:$0xff]
        %v860 = vld [vmem:[#allocation2 + $0x48] sm:$0xff]
        %v861 = vld [vmem:[#allocation2 + $0x50] sm:$0xff]
        %v862 = vld [vmem:[#allocation2 + $0x58] sm:$0xff]
        %v863 = vld [vmem:[#allocation2 + $0x60] sm:$0xff]
        %v864 = vld [vmem:[#allocation2 + $0x68] sm:$0xff]
        %v865 = vld [vmem:[#allocation2 + $0x70] sm:$0xff]
        %v866 = vld [vmem:[#allocation2 + $0x78] sm:$0xff]
        %v867 = vld [vmem:[#allocation2 + $0x80] sm:$0xff]
        %v868 = vld [vmem:[#allocation2 + $0x88] sm:$0xff]
        %v869 = vld [vmem:[#allocation2 + $0x90] sm:$0xff]
        %v870 = vld [vmem:[#allocation2 + $0x98] sm:$0xff]
        %v871 = vmul.f32 %v851, 0.0625
        %v872 = vmul.f32 %v852, 0.0625
        %v873 = vmul.f32 %v853, 0.0625
        %v874 = vmul.f32 %v854, 0.0625
        %v875 = vmul.f32 %v855, 0.0625
        %v876 = vmul.f32 %v856, 0.0625
        %v877 = vmul.f32 %v857, 0.0625
        %v878 = vmul.f32 %v858, 0.0625
        %v879 = vmul.f32 %v859, 0.0625
        %v880 = vmul.f32 %v860, 0.0625
        %v881 = vmul.f32 %v861, 0.0625
        %v882 = vmul.f32 %v862, 0.0625
        %v883 = vmul.f32 %v863, 0.0625
        %v884 = vmul.f32 %v864, 0.0625
        %v885 = vmul.f32 %v865, 0.0625
        %v886 = vmul.f32 %v866, 0.0625
        %v887 = vmul.f32 %v867, 0.0625
        %v888 = vmul.f32 %v868, 0.0625
        %v889 = vmul.f32 %v869, 0.0625
        %v890 = vmul.f32 %v870, 0.0625
        %v891 = vmul.f32 %v871, %v871
        %v892 = vmul.f32 %v872, %v872
        %v893 = vmul.f32 %v873, %v873
        %v894 = vmul.f32 %v874, %v874
        %v895 = vmul.f32 %v875, %v875
        %v896 = vmul.f32 %v876, %v876
        %v897 = vmul.f32 %v877, %v877
        %v898 = vmul.f32 %v878, %v878
        %v899 = vmul.f32 %v879, %v879
        %v900 = vmul.f32 %v880, %v880
        %v901 = vmul.f32 %v881, %v881
        %v902 = vmul.f32 %v882, %v882
        %v903 = vmul.f32 %v883, %v883
        %v904 = vmul.f32 %v884, %v884
        %v905 = vmul.f32 %v885, %v885
        %v906 = vmul.f32 %v886, %v886
        %v907 = vmul.f32 %v887, %v887
        %v908 = vmul.f32 %v888, %v888
        %v909 = vmul.f32 %v889, %v889
        %v910 = vmul.f32 %v890, %v890
        %931 = vrot.lane.b32.xlu0 %v891, 1
        %v932 = vpop.permute.xlu0 %931
        %933 = vrot.lane.b32.xlu0 %v892, 1
        %v934 = vpop.permute.xlu0 %933
        %935 = vrot.lane.b32.xlu0 %v893, 1
        %v936 = vpop.permute.xlu0 %935
        %937 = vrot.lane.b32.xlu0 %v894, 1
        %v938 = vpop.permute.xlu0 %937
        %939 = vrot.lane.b32.xlu0 %v895, 1
        %v940 = vpop.permute.xlu0 %939
        %941 = vrot.lane.b32.xlu0 %v896, 1
        %v942 = vpop.permute.xlu0 %941
        %943 = vrot.lane.b32.xlu0 %v897, 1
        %v944 = vpop.permute.xlu0 %943
        %945 = vrot.lane.b32.xlu0 %v898, 1
        %v946 = vpop.permute.xlu0 %945
        %947 = vrot.lane.b32.xlu0 %v899, 1
        %v948 = vpop.permute.xlu0 %947
        %949 = vrot.lane.b32.xlu0 %v900, 1
        %v950 = vpop.permute.xlu0 %949
        %951 = vrot.lane.b32.xlu0 %v901, 1
        %v952 = vpop.permute.xlu0 %951
        %953 = vrot.lane.b32.xlu0 %v902, 1
        %v954 = vpop.permute.xlu0 %953
        %955 = vrot.lane.b32.xlu0 %v903, 1
        %v956 = vpop.permute.xlu0 %955
        %957 = vrot.lane.b32.xlu0 %v904, 1
        %v958 = vpop.permute.xlu0 %957
        %959 = vrot.lane.b32.xlu0 %v905, 1
        %v960 = vpop.permute.xlu0 %959
        %961 = vrot.lane.b32.xlu0 %v906, 1
        %v962 = vpop.permute.xlu0 %961
        %963 = vrot.lane.b32.xlu0 %v907, 1
        %v964 = vpop.permute.xlu0 %963
        %965 = vrot.lane.b32.xlu0 %v908, 1
        %v966 = vpop.permute.xlu0 %965
        %967 = vrot.lane.b32.xlu0 %v909, 1
        %v968 = vpop.permute.xlu0 %967
        %969 = vrot.lane.b32.xlu0 %v910, 1
        %v970 = vpop.permute.xlu0 %969
        %v991 = vsub.f32 %v871, %v932
        %v992 = vsub.f32 %v872, %v934
        %v993 = vsub.f32 %v873, %v936
        %v994 = vsub.f32 %v874, %v938
        %v995 = vsub.f32 %v875, %v940
        %v996 = vsub.f32 %v876, %v942
        %v997 = vsub.f32 %v877, %v944
        %v998 = vsub.f32 %v878, %v946
        %v999 = vsub.f32 %v879, %v948
        %v1000 = vsub.f32 %v880, %v950
        %v1001 = vsub.f32 %v881, %v952
        %v1002 = vsub.f32 %v882, %v954
        %v1003 = vsub.f32 %v883, %v956
        %v1004 = vsub.f32 %v884, %v958
        %v1005 = vsub.f32 %v885, %v960
        %v1006 = vsub.f32 %v886, %v962
        %v1007 = vsub.f32 %v887, %v964
        %v1008 = vsub.f32 %v888, %v966
        %v1009 = vsub.f32 %v889, %v968
        %v1010 = vsub.f32 %v890, %v970
        %v1011 = vld [vmem:[%s2] sm:$0xff]
        %v1012 = vld [vmem:[%s2 + $0x8] sm:$0xff]
        %v1013 = vld [vmem:[%s2 + $0x10] sm:$0xff]
        %v1014 = vld [vmem:[%s2 + $0x18] sm:$0xff]
        %v1015 = vld [vmem:[%s2 + $0x20] sm:$0xff]
        %v1016 = vld [vmem:[%s2 + $0x28] sm:$0xff]
        %v1017 = vld [vmem:[%s2 + $0x30] sm:$0xff]
        %v1018 = vld [vmem:[%s2 + $0x38] sm:$0xff]
        %v1019 = vld [vmem:[%s2 + $0x40] sm:$0xff]
        %v1020 = vld [vmem:[%s2 + $0x48] sm:$0xff]
        %v1021 = vld [vmem:[%s2 + $0x50] sm:$0xff]
        %v1022 = vld [vmem:[%s2 + $0x58] sm:$0xff]
        %v1023 = vld [vmem:[%s2 + $0x60] sm:$0xff]
        %v1024 = vld [vmem:[%s2 + $0x68] sm:$0xff]
        %v1025 = vld [vmem:[%s2 + $0x70] sm:$0xff]
        %v1026 = vld [vmem:[%s2 + $0x78] sm:$0xff]
        %v1027 = vld [vmem:[%s2 + $0x80] sm:$0xff]
        %v1028 = vld [vmem:[%s2 + $0x88] sm:$0xff]
        %v1029 = vld [vmem:[%s2 + $0x90] sm:$0xff]
        %v1030 = vld [vmem:[%s2 + $0x98] sm:$0xff]
        %v1031 = vadd.f32 %v991, 1e-05
        %v1032 = vadd.f32 %v992, 1e-05
        %v1033 = vadd.f32 %v993, 1e-05
        %v1034 = vadd.f32 %v994, 1e-05
        %v1035 = vadd.f32 %v995, 1e-05
        %v1036 = vadd.f32 %v996, 1e-05
        %v1037 = vadd.f32 %v997, 1e-05
        %v1038 = vadd.f32 %v998, 1e-05
        %v1039 = vadd.f32 %v999, 1e-05
        %v1040 = vadd.f32 %v1000, 1e-05
        %v1041 = vadd.f32 %v1001, 1e-05
        %v1042 = vadd.f32 %v1002, 1e-05
        %v1043 = vadd.f32 %v1003, 1e-05
        %v1044 = vadd.f32 %v1004, 1e-05
        %v1045 = vadd.f32 %v1005, 1e-05
        %v1046 = vadd.f32 %v1006, 1e-05
        %v1047 = vadd.f32 %v1007, 1e-05
        %v1048 = vadd.f32 %v1008, 1e-05
        %v1049 = vadd.f32 %v1009, 1e-05
        %v1050 = vadd.f32 %v1010, 1e-05
        %v1051 = vrsqrt.pop %v1031
        %v1052 = vrsqrt.pop %v1032
        %v1053 = vrsqrt.pop %v1033
        %v1054 = vrsqrt.pop %v1034
        %v1055 = vrsqrt.pop %v1035
        %v1056 = vrsqrt.pop %v1036
        %v1057 = vrsqrt.pop %v1037
        %v1058 = vrsqrt.pop %v1038
        %v1059 = vrsqrt.pop %v1039
        %v1060 = vrsqrt.pop %v1040
        %v1061 = vrsqrt.pop %v1041
        %v1062 = vrsqrt.pop %v1042
        %v1063 = vrsqrt.pop %v1043
        %v1064 = vrsqrt.pop %v1044
        %v1065 = vrsqrt.pop %v1045
        %v1066 = vrsqrt.pop %v1046
        %v1067 = vrsqrt.pop %v1047
        %v1068 = vrsqrt.pop %v1048
        %v1069 = vrsqrt.pop %v1049
        %v1070 = vrsqrt.pop %v1050
        %1091 = vrot.lane.b32.xlu0 %v1051, 127
        %v1092 = vpop.permute.xlu0 %1091
        %1093 = vrot.lane.b32.xlu0 %v1052, 127
        %v1094 = vpop.permute.xlu0 %1093
        %1095 = vrot.lane.b32.xlu0 %v1053, 127
        %v1096 = vpop.permute.xlu0 %1095
        %1097 = vrot.lane.b32.xlu0 %v1054, 127
        %v1098 = vpop.permute.xlu0 %1097
        %1099 = vrot.lane.b32.xlu0 %v1055, 127
        %v1100 = vpop.permute.xlu0 %1099
        %1101 = vrot.lane.b32.xlu0 %v1056, 127
        %v1102 = vpop.permute.xlu0 %1101
        %1103 = vrot.lane.b32.xlu0 %v1057, 127
        %v1104 = vpop.permute.xlu0 %1103
        %1105 = vrot.lane.b32.xlu0 %v1058, 127
        %v1106 = vpop.permute.xlu0 %1105
        %1107 = vrot.lane.b32.xlu0 %v1059, 127
        %v1108 = vpop.permute.xlu0 %1107
        %1109 = vrot.lane.b32.xlu0 %v1060, 127
        %v1110 = vpop.permute.xlu0 %1109
        %1111 = vrot.lane.b32.xlu0 %v1061, 127
        %v1112 = vpop.permute.xlu0 %1111
        %1113 = vrot.lane.b32.xlu0 %v1062, 127
        %v1114 = vpop.permute.xlu0 %1113
        %1115 = vrot.lane.b32.xlu0 %v1063, 127
        %v1116 = vpop.permute.xlu0 %1115
        %1117 = vrot.lane.b32.xlu0 %v1064, 127
        %v1118 = vpop.permute.xlu0 %1117
        %1119 = vrot.lane.b32.xlu0 %v1065, 127
        %v1120 = vpop.permute.xlu0 %1119
        %1121 = vrot.lane.b32.xlu0 %v1066, 127
        %v1122 = vpop.permute.xlu0 %1121
        %1123 = vrot.lane.b32.xlu0 %v1067, 127
        %v1124 = vpop.permute.xlu0 %1123
        %1125 = vrot.lane.b32.xlu0 %v1068, 127
        %v1126 = vpop.permute.xlu0 %1125
        %1127 = vrot.lane.b32.xlu0 %v1069, 127
        %v1128 = vpop.permute.xlu0 %1127
        %1129 = vrot.lane.b32.xlu0 %v1070, 127
        %v1130 = vpop.permute.xlu0 %1129
        %v1151 = vmul.f32 %v1011, %v1092
        %v1152 = vmul.f32 %v1012, %v1094
        %v1153 = vmul.f32 %v1013, %v1096
        %v1154 = vmul.f32 %v1014, %v1098
        %v1155 = vmul.f32 %v1015, %v1100
        %v1156 = vmul.f32 %v1016, %v1102
        %v1157 = vmul.f32 %v1017, %v1104
        %v1158 = vmul.f32 %v1018, %v1106
        %v1159 = vmul.f32 %v1019, %v1108
        %v1160 = vmul.f32 %v1020, %v1110
        %v1161 = vmul.f32 %v1021, %v1112
        %v1162 = vmul.f32 %v1022, %v1114
        %v1163 = vmul.f32 %v1023, %v1116
        %v1164 = vmul.f32 %v1024, %v1118
        %v1165 = vmul.f32 %v1025, %v1120
        %v1166 = vmul.f32 %v1026, %v1122
        %v1167 = vmul.f32 %v1027, %v1124
        %v1168 = vmul.f32 %v1028, %v1126
        %v1169 = vmul.f32 %v1029, %v1128
        %v1170 = vmul.f32 %v1030, %v1130
        %vm1171 = vcmask 7168
        %1172 = vst.msk [vmem:[#allocation2] sm:$0xff] %vm1171, %v1151
        %1173 = vst.msk [vmem:[#allocation2 + $0x8] sm:$0xff] %vm1171, %v1152
        %1174 = vst.msk [vmem:[#allocation2 + $0x10] sm:$0xff] %vm1171, %v1153
        %1175 = vst.msk [vmem:[#allocation2 + $0x18] sm:$0xff] %vm1171, %v1154
        %1176 = vst.msk [vmem:[#allocation2 + $0x20] sm:$0xff] %vm1171, %v1155
        %1177 = vst.msk [vmem:[#allocation2 + $0x28] sm:$0xff] %vm1171, %v1156
        %1178 = vst.msk [vmem:[#allocation2 + $0x30] sm:$0xff] %vm1171, %v1157
        %1179 = vst.msk [vmem:[#allocation2 + $0x38] sm:$0xff] %vm1171, %v1158
        %1180 = vst.msk [vmem:[#allocation2 + $0x40] sm:$0xff] %vm1171, %v1159
        %1181 = vst.msk [vmem:[#allocation2 + $0x48] sm:$0xff] %vm1171, %v1160
        %1182 = vst.msk [vmem:[#allocation2 + $0x50] sm:$0xff] %vm1171, %v1161
        %1183 = vst.msk [vmem:[#allocation2 + $0x58] sm:$0xff] %vm1171, %v1162
        %1184 = vst.msk [vmem:[#allocation2 + $0x60] sm:$0xff] %vm1171, %v1163
        %1185 = vst.msk [vmem:[#allocation2 + $0x68] sm:$0xff] %vm1171, %v1164
        %1186 = vst.msk [vmem:[#allocation2 + $0x70] sm:$0xff] %vm1171, %v1165
        %1187 = vst.msk [vmem:[#allocation2 + $0x78] sm:$0xff] %vm1171, %v1166
        %1188 = vst.msk [vmem:[#allocation2 + $0x80] sm:$0xff] %vm1171, %v1167
        %1189 = vst.msk [vmem:[#allocation2 + $0x88] sm:$0xff] %vm1171, %v1168
        %1190 = vst.msk [vmem:[#allocation2 + $0x90] sm:$0xff] %vm1171, %v1169
        %1191 = vst.msk [vmem:[#allocation2 + $0x98] sm:$0xff] %vm1171, %v1170
        %v1192 = vld [vmem:[%s2] sm:$0xff]
        %v1193 = vld [vmem:[%s2 + $0x8] sm:$0xff]
        %v1194 = vld [vmem:[%s2 + $0x10] sm:$0xff]
        %v1195 = vld [vmem:[%s2 + $0x18] sm:$0xff]
        %v1196 = vld [vmem:[%s2 + $0x20] sm:$0xff]
        %v1197 = vld [vmem:[%s2 + $0x28] sm:$0xff]
        %v1198 = vld [vmem:[%s2 + $0x30] sm:$0xff]
        %v1199 = vld [vmem:[%s2 + $0x38] sm:$0xff]
        %v1200 = vld [vmem:[%s2 + $0x40] sm:$0xff]
        %v1201 = vld [vmem:[%s2 + $0x48] sm:$0xff]
        %v1202 = vld [vmem:[%s2 + $0x50] sm:$0xff]
        %v1203 = vld [vmem:[%s2 + $0x58] sm:$0xff]
        %v1204 = vld [vmem:[%s2 + $0x60] sm:$0xff]
        %v1205 = vld [vmem:[%s2 + $0x68] sm:$0xff]
        %v1206 = vld [vmem:[%s2 + $0x70] sm:$0xff]
        %v1207 = vld [vmem:[%s2 + $0x78] sm:$0xff]
        %v1208 = vld [vmem:[%s2 + $0x80] sm:$0xff]
        %v1209 = vld [vmem:[%s2 + $0x88] sm:$0xff]
        %v1210 = vld [vmem:[%s2 + $0x90] sm:$0xff]
        %v1211 = vld [vmem:[%s2 + $0x98] sm:$0xff]
        %v1212 = vmul.f32 %v871, %v1151
        %v1213 = vmul.f32 %v872, %v1152
        %v1214 = vmul.f32 %v873, %v1153
        %v1215 = vmul.f32 %v874, %v1154
        %v1216 = vmul.f32 %v875, %v1155
        %v1217 = vmul.f32 %v876, %v1156
        %v1218 = vmul.f32 %v877, %v1157
        %v1219 = vmul.f32 %v878, %v1158
        %v1220 = vmul.f32 %v879, %v1159
        %v1221 = vmul.f32 %v880, %v1160
        %v1222 = vmul.f32 %v881, %v1161
        %v1223 = vmul.f32 %v882, %v1162
        %v1224 = vmul.f32 %v883, %v1163
        %v1225 = vmul.f32 %v884, %v1164
        %v1226 = vmul.f32 %v885, %v1165
        %v1227 = vmul.f32 %v886, %v1166
        %v1228 = vmul.f32 %v887, %v1167
        %v1229 = vmul.f32 %v888, %v1168
        %v1230 = vmul.f32 %v889, %v1169
        %v1231 = vmul.f32 %v890, %v1170
        %1252 = vrot.lane.b32.xlu0 %v1212, 1
        %v1253 = vpop.permute.xlu0 %1252
        %1254 = vrot.lane.b32.xlu0 %v1213, 1
        %v1255 = vpop.permute.xlu0 %1254
        %1256 = vrot.lane.b32.xlu0 %v1214, 1
        %v1257 = vpop.permute.xlu0 %1256
        %1258 = vrot.lane.b32.xlu0 %v1215, 1
        %v1259 = vpop.permute.xlu0 %1258
        %1260 = vrot.lane.b32.xlu0 %v1216, 1
        %v1261 = vpop.permute.xlu0 %1260
        %1262 = vrot.lane.b32.xlu0 %v1217, 1
        %v1263 = vpop.permute.xlu0 %1262
        %1264 = vrot.lane.b32.xlu0 %v1218, 1
        %v1265 = vpop.permute.xlu0 %1264
        %1266 = vrot.lane.b32.xlu0 %v1219, 1
        %v1267 = vpop.permute.xlu0 %1266
        %1268 = vrot.lane.b32.xlu0 %v1220, 1
        %v1269 = vpop.permute.xlu0 %1268
        %1270 = vrot.lane.b32.xlu0 %v1221, 1
        %v1271 = vpop.permute.xlu0 %1270
        %1272 = vrot.lane.b32.xlu0 %v1222, 1
        %v1273 = vpop.permute.xlu0 %1272
        %1274 = vrot.lane.b32.xlu0 %v1223, 1
        %v1275 = vpop.permute.xlu0 %1274
        %1276 = vrot.lane.b32.xlu0 %v1224, 1
        %v1277 = vpop.permute.xlu0 %1276
        %1278 = vrot.lane.b32.xlu0 %v1225, 1
        %v1279 = vpop.permute.xlu0 %1278
        %1280 = vrot.lane.b32.xlu0 %v1226, 1
        %v1281 = vpop.permute.xlu0 %1280
        %1282 = vrot.lane.b32.xlu0 %v1227, 1
        %v1283 = vpop.permute.xlu0 %1282
        %1284 = vrot.lane.b32.xlu0 %v1228, 1
        %v1285 = vpop.permute.xlu0 %1284
        %1286 = vrot.lane.b32.xlu0 %v1229, 1
        %v1287 = vpop.permute.xlu0 %1286
        %1288 = vrot.lane.b32.xlu0 %v1230, 1
        %v1289 = vpop.permute.xlu0 %1288
        %1290 = vrot.lane.b32.xlu0 %v1231, 1
        %v1291 = vpop.permute.xlu0 %1290
        %v1312 = vsub.f32 %v1192, %v1253
        %v1313 = vsub.f32 %v1193, %v1255
        %v1314 = vsub.f32 %v1194, %v1257
        %v1315 = vsub.f32 %v1195, %v1259
        %v1316 = vsub.f32 %v1196, %v1261
        %v1317 = vsub.f32 %v1197, %v1263
        %v1318 = vsub.f32 %v1198, %v1265
        %v1319 = vsub.f32 %v1199, %v1267
        %v1320 = vsub.f32 %v1200, %v1269
        %v1321 = vsub.f32 %v1201, %v1271
        %v1322 = vsub.f32 %v1202, %v1273
        %v1323 = vsub.f32 %v1203, %v1275
        %v1324 = vsub.f32 %v1204, %v1277
        %v1325 = vsub.f32 %v1205, %v1279
        %v1326 = vsub.f32 %v1206, %v1281
        %v1327 = vsub.f32 %v1207, %v1283
        %v1328 = vsub.f32 %v1208, %v1285
        %v1329 = vsub.f32 %v1209, %v1287
        %v1330 = vsub.f32 %v1210, %v1289
        %v1331 = vsub.f32 %v1211, %v1291
        %vm1332 = vcmask 15368
        %1333 = vst.msk [vmem:[#allocation2] sm:$0xff] %vm1332, %v1312
        %1334 = vst.msk [vmem:[#allocation2 + $0x8] sm:$0xff] %vm1332, %v1313
        %1335 = vst.msk [vmem:[#allocation2 + $0x10] sm:$0xff] %vm1332, %v1314
        %1336 = vst.msk [vmem:[#allocation2 + $0x18] sm:$0xff] %vm1332, %v1315
        %1337 = vst.msk [vmem:[#allocation2 + $0x20] sm:$0xff] %vm1332, %v1316
        %1338 = vst.msk [vmem:[#allocation2 + $0x28] sm:$0xff] %vm1332, %v1317
        %1339 = vst.msk [vmem:[#allocation2 + $0x30] sm:$0xff] %vm1332, %v1318
        %1340 = vst.msk [vmem:[#allocation2 + $0x38] sm:$0xff] %vm1332, %v1319
        %1341 = vst.msk [vmem:[#allocation2 + $0x40] sm:$0xff] %vm1332, %v1320
        %1342 = vst.msk [vmem:[#allocation2 + $0x48] sm:$0xff] %vm1332, %v1321
        %1343 = vst.msk [vmem:[#allocation2 + $0x50] sm:$0xff] %vm1332, %v1322
        %1344 = vst.msk [vmem:[#allocation2 + $0x58] sm:$0xff] %vm1332, %v1323
        %1345 = vst.msk [vmem:[#allocation2 + $0x60] sm:$0xff] %vm1332, %v1324
        %1346 = vst.msk [vmem:[#allocation2 + $0x68] sm:$0xff] %vm1332, %v1325
        %1347 = vst.msk [vmem:[#allocation2 + $0x70] sm:$0xff] %vm1332, %v1326
        %1348 = vst.msk [vmem:[#allocation2 + $0x78] sm:$0xff] %vm1332, %v1327
        %1349 = vst.msk [vmem:[#allocation2 + $0x80] sm:$0xff] %vm1332, %v1328
        %1350 = vst.msk [vmem:[#allocation2 + $0x88] sm:$0xff] %vm1332, %v1329
        %1351 = vst.msk [vmem:[#allocation2 + $0x90] sm:$0xff] %vm1332, %v1330
        %1352 = vst.msk [vmem:[#allocation2 + $0x98] sm:$0xff] %vm1332, %v1331
      $region60: #{generator_forward.1} parent=43 // pred_fallthru
        _
      %p1353 = scmp.ge.s32.totalorder %s22, 1
      // Predicated region
      $region61: #{generator_forward.1} parent=43 // pred_check
        %p1354 = pneg %p1353
      $region62: #{generator_forward.1} parent=43 // pred_check_branch
        %1356 = sbr.rel (%p1354) target = $region64
      $region63: #{generator_forward.1} parent=43 // pred_region
        %v1357 = vld [vmem:[#allocation2] sm:$0xff]
        %v1358 = vld [vmem:[#allocation2 + $0x8] sm:$0xff]
        %v1359 = vld [vmem:[#allocation2 + $0x10] sm:$0xff]
        %v1360 = vld [vmem:[#allocation2 + $0x18] sm:$0xff]
        %v1361 = vld [vmem:[#allocation2 + $0x20] sm:$0xff]
        %v1362 = vld [vmem:[#allocation2 + $0x28] sm:$0xff]
        %v1363 = vld [vmem:[#allocation2 + $0x30] sm:$0xff]
        %v1364 = vld [vmem:[#allocation2 + $0x38] sm:$0xff]
        %v1365 = vld [vmem:[#allocation2 + $0x40] sm:$0xff]
        %v1366 = vld [vmem:[#allocation2 + $0x48] sm:$0xff]
        %v1367 = vld [vmem:[#allocation2 + $0x50] sm:$0xff]
        %v1368 = vld [vmem:[#allocation2 + $0x58] sm:$0xff]
        %v1369 = vld [vmem:[#allocation2 + $0x60] sm:$0xff]
        %v1370 = vld [vmem:[#allocation2 + $0x68] sm:$0xff]
        %v1371 = vld [vmem:[#allocation2 + $0x70] sm:$0xff]
        %v1372 = vld [vmem:[#allocation2 + $0x78] sm:$0xff]
        %v1373 = vld [vmem:[#allocation2 + $0x80] sm:$0xff]
        %v1374 = vld [vmem:[#allocation2 + $0x88] sm:$0xff]
        %v1375 = vld [vmem:[#allocation2 + $0x90] sm:$0xff]
        %v1376 = vld [vmem:[#allocation2 + $0x98] sm:$0xff]
        %1378 = vset.pattern.permute.xlu0 0
        %1379 = vperm.xlu0 %1378, %v1357
        %v1380 = vpop.permute.xlu0 %1379
        %1383 = vset.pattern.permute.xlu0 0
        %1384 = vperm.xlu0 %1383, %v1358
        %v1385 = vpop.permute.xlu0 %1384
        %1388 = vset.pattern.permute.xlu0 0
        %1389 = vperm.xlu0 %1388, %v1359
        %v1390 = vpop.permute.xlu0 %1389
        %1393 = vset.pattern.permute.xlu0 0
        %1394 = vperm.xlu0 %1393, %v1360
        %v1395 = vpop.permute.xlu0 %1394
        %1398 = vset.pattern.permute.xlu0 0
        %1399 = vperm.xlu0 %1398, %v1361
        %v1400 = vpop.permute.xlu0 %1399
        %1403 = vset.pattern.permute.xlu0 0
        %1404 = vperm.xlu0 %1403, %v1362
        %v1405 = vpop.permute.xlu0 %1404
        %1408 = vset.pattern.permute.xlu0 0
        %1409 = vperm.xlu0 %1408, %v1363
        %v1410 = vpop.permute.xlu0 %1409
        %1413 = vset.pattern.permute.xlu0 0
        %1414 = vperm.xlu0 %1413, %v1364
        %v1415 = vpop.permute.xlu0 %1414
        %1418 = vset.pattern.permute.xlu0 0
        %1419 = vperm.xlu0 %1418, %v1365
        %v1420 = vpop.permute.xlu0 %1419
        %1423 = vset.pattern.permute.xlu0 0
        %1424 = vperm.xlu0 %1423, %v1366
        %v1425 = vpop.permute.xlu0 %1424
        %1428 = vset.pattern.permute.xlu0 0
        %1429 = vperm.xlu0 %1428, %v1367
        %v1430 = vpop.permute.xlu0 %1429
        %1433 = vset.pattern.permute.xlu0 0
        %1434 = vperm.xlu0 %1433, %v1368
        %v1435 = vpop.permute.xlu0 %1434
        %1438 = vset.pattern.permute.xlu0 0
        %1439 = vperm.xlu0 %1438, %v1369
        %v1440 = vpop.permute.xlu0 %1439
        %1443 = vset.pattern.permute.xlu0 0
        %1444 = vperm.xlu0 %1443, %v1370
        %v1445 = vpop.permute.xlu0 %1444
        %1448 = vset.pattern.permute.xlu0 0
        %1449 = vperm.xlu0 %1448, %v1371
        %v1450 = vpop.permute.xlu0 %1449
        %1453 = vset.pattern.permute.xlu0 0
        %1454 = vperm.xlu0 %1453, %v1372
        %v1455 = vpop.permute.xlu0 %1454
        %1458 = vset.pattern.permute.xlu0 0
        %1459 = vperm.xlu0 %1458, %v1373
        %v1460 = vpop.permute.xlu0 %1459
        %1463 = vset.pattern.permute.xlu0 0
        %1464 = vperm.xlu0 %1463, %v1374
        %v1465 = vpop.permute.xlu0 %1464
        %1468 = vset.pattern.permute.xlu0 0
        %1469 = vperm.xlu0 %1468, %v1375
        %v1470 = vpop.permute.xlu0 %1469
        %1473 = vset.pattern.permute.xlu0 0
        %1474 = vperm.xlu0 %1473, %v1376
        %v1475 = vpop.permute.xlu0 %1474
        %v1477 = vmul.f32 %v503, %v1380
        %v1478 = vmul.f32 %v506, %v1385
        %v1479 = vmul.f32 %v511, %v1390
        %v1480 = vmul.f32 %v514, %v1395
        %v1481 = vmul.f32 %v519, %v1400
        %v1482 = vmul.f32 %v522, %v1405
        %v1483 = vmul.f32 %v527, %v1410
        %v1484 = vmul.f32 %v530, %v1415
        %v1485 = vmul.f32 %v535, %v1420
        %v1486 = vmul.f32 %v538, %v1425
        %v1487 = vmul.f32 %v543, %v1430
        %v1488 = vmul.f32 %v546, %v1435
        %v1489 = vmul.f32 %v551, %v1440
        %v1490 = vmul.f32 %v554, %v1445
        %v1491 = vmul.f32 %v559, %v1450
        %v1492 = vmul.f32 %v562, %v1455
        %v1493 = vmul.f32 %v567, %v1460
        %v1494 = vmul.f32 %v570, %v1465
        %v1495 = vmul.f32 %v575, %v1470
        %v1496 = vmul.f32 %v578, %v1475
        %1497 = vset.pattern.permute.xlu0 1
        %1498 = vperm.xlu0 %1497, %v1357
        %v1499 = vpop.permute.xlu0 %1498
        %1501 = vset.pattern.permute.xlu0 1
        %1502 = vperm.xlu0 %1501, %v1358
        %v1503 = vpop.permute.xlu0 %1502
        %1505 = vset.pattern.permute.xlu0 1
        %1506 = vperm.xlu0 %1505, %v1359
        %v1507 = vpop.permute.xlu0 %1506
        %1509 = vset.pattern.permute.xlu0 1
        %1510 = vperm.xlu0 %1509, %v1360
        %v1511 = vpop.permute.xlu0 %1510
        %1513 = vset.pattern.permute.xlu0 1
        %1514 = vperm.xlu0 %1513, %v1361
        %v1515 = vpop.permute.xlu0 %1514
        %1517 = vset.pattern.permute.xlu0 1
        %1518 = vperm.xlu0 %1517, %v1362
        %v1519 = vpop.permute.xlu0 %1518
        %1521 = vset.pattern.permute.xlu0 1
        %1522 = vperm.xlu0 %1521, %v1363
        %v1523 = vpop.permute.xlu0 %1522
        %1525 = vset.pattern.permute.xlu0 1
        %1526 = vperm.xlu0 %1525, %v1364
        %v1527 = vpop.permute.xlu0 %1526
        %1529 = vset.pattern.permute.xlu0 1
        %1530 = vperm.xlu0 %1529, %v1365
        %v1531 = vpop.permute.xlu0 %1530
        %1533 = vset.pattern.permute.xlu0 1
        %1534 = vperm.xlu0 %1533, %v1366
        %v1535 = vpop.permute.xlu0 %1534
        %1537 = vset.pattern.permute.xlu0 1
        %1538 = vperm.xlu0 %1537, %v1367
        %v1539 = vpop.permute.xlu0 %1538
        %1541 = vset.pattern.permute.xlu0 1
        %1542 = vperm.xlu0 %1541, %v1368
        %v1543 = vpop.permute.xlu0 %1542
        %1545 = vset.pattern.permute.xlu0 1
        %1546 = vperm.xlu0 %1545, %v1369
        %v1547 = vpop.permute.xlu0 %1546
        %1549 = vset.pattern.permute.xlu0 1
        %1550 = vperm.xlu0 %1549, %v1370
        %v1551 = vpop.permute.xlu0 %1550
        %1553 = vset.pattern.permute.xlu0 1
        %1554 = vperm.xlu0 %1553, %v1371
        %v1555 = vpop.permute.xlu0 %1554
        %1557 = vset.pattern.permute.xlu0 1
        %1558 = vperm.xlu0 %1557, %v1372
        %v1559 = vpop.permute.xlu0 %1558
        %1561 = vset.pattern.permute.xlu0 1
        %1562 = vperm.xlu0 %1561, %v1373
        %v1563 = vpop.permute.xlu0 %1562
        %1565 = vset.pattern.permute.xlu0 1
        %1566 = vperm.xlu0 %1565, %v1374
        %v1567 = vpop.permute.xlu0 %1566
        %1569 = vset.pattern.permute.xlu0 1
        %1570 = vperm.xlu0 %1569, %v1375
        %v1571 = vpop.permute.xlu0 %1570
        %1573 = vset.pattern.permute.xlu0 1
        %1574 = vperm.xlu0 %1573, %v1376
        %v1575 = vpop.permute.xlu0 %1574
        %v1577 = vadd.f32 %v1477, %v1499
        %v1578 = vadd.f32 %v1478, %v1503
        %v1579 = vadd.f32 %v1479, %v1507
        %v1580 = vadd.f32 %v1480, %v1511
        %v1581 = vadd.f32 %v1481, %v1515
        %v1582 = vadd.f32 %v1482, %v1519
        %v1583 = vadd.f32 %v1483, %v1523
        %v1584 = vadd.f32 %v1484, %v1527
        %v1585 = vadd.f32 %v1485, %v1531
        %v1586 = vadd.f32 %v1486, %v1535
        %v1587 = vadd.f32 %v1487, %v1539
        %v1588 = vadd.f32 %v1488, %v1543
        %v1589 = vadd.f32 %v1489, %v1547
        %v1590 = vadd.f32 %v1490, %v1551
        %v1591 = vadd.f32 %v1491, %v1555
        %v1592 = vadd.f32 %v1492, %v1559
        %v1593 = vadd.f32 %v1493, %v1563
        %v1594 = vadd.f32 %v1494, %v1567
        %v1595 = vadd.f32 %v1495, %v1571
        %v1596 = vadd.f32 %v1496, %v1575
        %v1597 = vmax.f32 %v1577, 0.0
        %v1598 = vmax.f32 %v1578, 0.0
        %v1599 = vmax.f32 %v1579, 0.0
        %v1600 = vmax.f32 %v1580, 0.0
        %v1601 = vmax.f32 %v1581, 0.0
        %v1602 = vmax.f32 %v1582, 0.0
        %v1603 = vmax.f32 %v1583, 0.0
        %v1604 = vmax.f32 %v1584, 0.0
        %v1605 = vmax.f32 %v1585, 0.0
        %v1606 = vmax.f32 %v1586, 0.0
        %v1607 = vmax.f32 %v1587, 0.0
        %v1608 = vmax.f32 %v1588, 0.0
        %v1609 = vmax.f32 %v1589, 0.0
        %v1610 = vmax.f32 %v1590, 0.0
        %v1611 = vmax.f32 %v1591, 0.0
        %v1612 = vmax.f32 %v1592, 0.0
        %v1613 = vmax.f32 %v1593, 0.0
        %v1614 = vmax.f32 %v1594, 0.0
        %v1615 = vmax.f32 %v1595, 0.0
        %v1616 = vmax.f32 %v1596, 0.0
        %v1617 = vld [vmem:[%s3] sm:$0xff]
        %v1618 = vld [vmem:[%s3 + $0x8] sm:$0xff]
        %v1619 = vld [vmem:[%s3 + $0x10] sm:$0xff]
        %v1620 = vld [vmem:[%s3 + $0x18] sm:$0xff]
        %v1621 = vld [vmem:[%s3 + $0x20] sm:$0xff]
        %v1622 = vld [vmem:[%s3 + $0x28] sm:$0xff]
        %v1623 = vld [vmem:[%s3 + $0x30] sm:$0xff]
        %v1624 = vld [vmem:[%s3 + $0x38] sm:$0xff]
        %v1625 = vld [vmem:[%s3 + $0x40] sm:$0xff]
        %v1626 = vld [vmem:[%s3 + $0x48] sm:$0xff]
        %v1627 = vld [vmem:[%s3 + $0x50] sm:$0xff]
        %v1628 = vld [vmem:[%s3 + $0x58] sm:$0xff]
        %v1629 = vld [vmem:[%s3 + $0x60] sm:$0xff]
        %v1630 = vld [vmem:[%s3 + $0x68] sm:$0xff]
        %v1631 = vld [vmem:[%s3 + $0x70] sm:$0xff]
        %v1632 = vld [vmem:[%s3 + $0x78] sm:$0xff]
        %v1633 = vpack.c.bf16 %v1598, %v1597
        %v1634 = vpack.c.bf16 %v1600, %v1599
        %v1635 = vpack.c.bf16 %v1602, %v1601
        %v1636 = vpack.c.bf16 %v1604, %v1603
        %v1637 = vpack.c.bf16 %v1606, %v1605
        %v1638 = vpack.c.bf16 %v1608, %v1607
        %v1639 = vpack.c.bf16 %v1610, %v1609
        %v1640 = vpack.c.bf16 %v1612, %v1611
        %v1641 = vpack.c.bf16 %v1614, %v1613
        %v1642 = vpack.c.bf16 %v1616, %v1615
        %v1659 = vunpack.c.l.b16 %v1617
        %v1660 = vunpack.c.h.b16 %v1617
        %v1661 = vunpack.c.l.b16 %v1618
        %v1662 = vunpack.c.h.b16 %v1618
        %v1663 = vunpack.c.l.b16 %v1619
        %v1664 = vunpack.c.h.b16 %v1619
        %v1665 = vunpack.c.l.b16 %v1620
        %v1666 = vunpack.c.h.b16 %v1620
        %v1667 = vunpack.c.l.b16 %v1621
        %v1668 = vunpack.c.h.b16 %v1621
        %v1669 = vunpack.c.l.b16 %v1622
        %v1670 = vunpack.c.h.b16 %v1622
        %v1671 = vunpack.c.l.b16 %v1623
        %v1672 = vunpack.c.h.b16 %v1623
        %v1673 = vunpack.c.l.b16 %v1624
        %v1674 = vunpack.c.h.b16 %v1624
        %v1675 = vunpack.c.l.b16 %v1625
        %v1676 = vunpack.c.h.b16 %v1625
        %v1677 = vunpack.c.l.b16 %v1626
        %v1678 = vunpack.c.h.b16 %v1626
        %v1679 = vunpack.c.l.b16 %v1627
        %v1680 = vunpack.c.h.b16 %v1627
        %v1681 = vunpack.c.l.b16 %v1628
        %v1682 = vunpack.c.h.b16 %v1628
        %v1683 = vunpack.c.l.b16 %v1629
        %v1684 = vunpack.c.h.b16 %v1629
        %v1685 = vunpack.c.l.b16 %v1630
        %v1686 = vunpack.c.h.b16 %v1630
        %v1687 = vunpack.c.l.b16 %v1631
        %v1688 = vunpack.c.h.b16 %v1631
        %v1689 = vunpack.c.l.b16 %v1632
        %v1690 = vunpack.c.h.b16 %v1632
        %v1691 = vpack.c.b16 %v1661, %v1659
        %v1692 = vpack.c.b16 %v1662, %v1660
        %v1693 = vpack.c.b16 %v1665, %v1663
        %v1694 = vpack.c.b16 %v1666, %v1664
        %v1695 = vpack.c.b16 %v1669, %v1667
        %v1696 = vpack.c.b16 %v1670, %v1668
        %v1697 = vpack.c.b16 %v1673, %v1671
        %v1698 = vpack.c.b16 %v1674, %v1672
        %v1699 = vpack.c.b16 %v1677, %v1675
        %v1700 = vpack.c.b16 %v1678, %v1676
        %v1701 = vpack.c.b16 %v1681, %v1679
        %v1702 = vpack.c.b16 %v1682, %v1680
        %v1703 = vpack.c.b16 %v1685, %v1683
        %v1704 = vpack.c.b16 %v1686, %v1684
        %v1705 = vpack.c.b16 %v1689, %v1687
        %v1706 = vpack.c.b16 %v1690, %v1688
        %v1716 = vsel %vm437, %v1692, 0
        %v1719 = vsel %vm437, %v1694, 0
        %v1722 = vsel %vm437, %v1696, 0
        %v1725 = vsel %vm437, %v1698, 0
        %v1728 = vsel %vm437, %v1700, 0
        %v1731 = vsel %vm437, %v1702, 0
        %v1734 = vsel %vm437, %v1704, 0
        %v1737 = vsel %vm437, %v1706, 0
        %1739 = vmatprep.subr.bf16.mxu0 0
        %1740 = vmatpush1.bf16.msra.mxu0 %v1640
        %1741 = vmatprep.subr.bf16.mxu0 0
        %1742 = vmatpush1.bf16.msra.mxu0 %v1639
        %1743 = vmatprep.subr.bf16.mxu0 0
        %1744 = vmatpush1.bf16.msra.mxu0 %v1638
        %1745 = vmatprep.subr.bf16.mxu0 0
        %1746 = vmatpush1.bf16.msra.mxu0 %v1637
        %1747 = vmatprep.subr.bf16.mxu0 0
        %1748 = vmatpush1.bf16.msra.mxu0 %v1636
        %1749 = vmatprep.subr.bf16.mxu0 0
        %1750 = vmatpush1.bf16.msra.mxu0 %v1635
        %1751 = vmatprep.subr.bf16.mxu0 0
        %1752 = vmatpush1.bf16.msra.mxu0 %v1634
        %1753 = vmatprep.subr.bf16.mxu0 0
        %1754 = vmatpush1.bf16.msra.mxu0 %v1633
        %1755 = vmatprep.subr.bf16.mxu0 0
        %1756 = vmatpush2.bf16.msra.mxu0 0
        %1757 = vmatprep.subr.bf16.mxu0 0
        %1758 = vmatpush2.bf16.msra.mxu0 0
        %1759 = vmatprep.subr.bf16.mxu0 0
        %1760 = vmatpush2.bf16.msra.mxu0 0
        %1761 = vmatprep.subr.bf16.mxu0 0
        %1762 = vmatpush2.bf16.msra.mxu0 0
        %1763 = vmatprep.subr.bf16.mxu0 0
        %1764 = vmatpush2.bf16.msra.mxu0 0
        %1765 = vmatprep.subr.bf16.mxu0 0
        %1766 = vmatpush2.bf16.msra.mxu0 0
        %1767 = vmatprep.subr.bf16.mxu0 0
        %1768 = vmatpush2.bf16.msra.mxu0 %v1642
        %1769 = vmatprep.subr.bf16.mxu0 0
        %1770 = vmatpush2.bf16.msra.mxu0 %v1641
        %1771 = vmatprep.mubr.bf16.mxu0 %v1716
        %1772 = vmatmul.mubr.bf16.gmra.mxu0 %v1691
        %v1773 = vpop.f32.mrf.mxu0
        %v1774 = vadd.f32 0.0, %v1773
        %v1775 = vpop.f32.mrf.mxu0
        %v1776 = vpop.f32.mrf.mxu0
        %v1777 = vadd.f32 0.0, %v1776
        %v1778 = vpop.f32.mrf.mxu0
        %1779 = vmatprep.mubr.bf16.mxu0 %v1719
        %1780 = vmatmul.mubr.bf16.gmra.mxu0 %v1693
        %v1781 = vpop.f32.mrf.mxu0
        %v1782 = vadd.f32 0.0, %v1781
        %v1783 = vpop.f32.mrf.mxu0
        %v1784 = vpop.f32.mrf.mxu0
        %v1785 = vadd.f32 0.0, %v1784
        %v1786 = vpop.f32.mrf.mxu0
        %1787 = vmatprep.mubr.bf16.mxu0 %v1722
        %1788 = vmatmul.mubr.bf16.gmra.mxu0 %v1695
        %v1789 = vpop.f32.mrf.mxu0
        %v1790 = vadd.f32 0.0, %v1789
        %v1791 = vpop.f32.mrf.mxu0
        %v1792 = vpop.f32.mrf.mxu0
        %v1793 = vadd.f32 0.0, %v1792
        %v1794 = vpop.f32.mrf.mxu0
        %1795 = vmatprep.mubr.bf16.mxu0 %v1725
        %1796 = vmatmul.mubr.bf16.gmra.mxu0 %v1697
        %v1797 = vpop.f32.mrf.mxu0
        %v1798 = vadd.f32 0.0, %v1797
        %v1799 = vpop.f32.mrf.mxu0
        %v1800 = vpop.f32.mrf.mxu0
        %v1801 = vadd.f32 0.0, %v1800
        %v1802 = vpop.f32.mrf.mxu0
        %1803 = vmatprep.mubr.bf16.mxu0 %v1728
        %1804 = vmatmul.mubr.bf16.gmra.mxu0 %v1699
        %v1805 = vpop.f32.mrf.mxu0
        %v1806 = vadd.f32 0.0, %v1805
        %v1807 = vpop.f32.mrf.mxu0
        %v1808 = vpop.f32.mrf.mxu0
        %v1809 = vadd.f32 0.0, %v1808
        %v1810 = vpop.f32.mrf.mxu0
        %1811 = vmatprep.mubr.bf16.mxu0 %v1731
        %1812 = vmatmul.mubr.bf16.gmra.mxu0 %v1701
        %v1813 = vpop.f32.mrf.mxu0
        %v1814 = vadd.f32 0.0, %v1813
        %v1815 = vpop.f32.mrf.mxu0
        %v1816 = vpop.f32.mrf.mxu0
        %v1817 = vadd.f32 0.0, %v1816
        %v1818 = vpop.f32.mrf.mxu0
        %1819 = vmatprep.mubr.bf16.mxu0 %v1734
        %1820 = vmatmul.mubr.bf16.gmra.mxu0 %v1703
        %v1821 = vpop.f32.mrf.mxu0
        %v1822 = vadd.f32 0.0, %v1821
        %v1823 = vpop.f32.mrf.mxu0
        %v1824 = vpop.f32.mrf.mxu0
        %v1825 = vadd.f32 0.0, %v1824
        %v1826 = vpop.f32.mrf.mxu0
        %1827 = vmatprep.mubr.bf16.mxu0 %v1737
        %1828 = vmatmul.mubr.bf16.gmra.mxu0 %v1705
        %v1829 = vpop.f32.mrf.mxu0
        %v1830 = vadd.f32 0.0, %v1829
        %v1831 = vpop.f32.mrf.mxu0
        %v1832 = vpop.f32.mrf.mxu0
        %v1833 = vadd.f32 0.0, %v1832
        %v1834 = vpop.f32.mrf.mxu0
        %1835 = vdwg.mxu0
        // Predicated region
        $region65: #{generator_forward.1} parent=63 // pred_check
          %p1836 = pneg %p339
        $region66: #{generator_forward.1} parent=63 // pred_check_branch
          %1838 = sbr.rel (%p1836) target = $region68
        $region67: #{generator_forward.1} parent=63 // pred_region
          %v1839 = vld [vmem:[#allocation3] sm:$0xff]
          %v1840 = vld [vmem:[#allocation3 + $0x8] sm:$0xff]
          %v1841 = vld [vmem:[#allocation3 + $0x10] sm:$0xff]
          %v1842 = vld [vmem:[#allocation3 + $0x18] sm:$0xff]
          %v1843 = vld [vmem:[#allocation3 + $0x20] sm:$0xff]
          %v1844 = vld [vmem:[#allocation3 + $0x28] sm:$0xff]
          %v1845 = vld [vmem:[#allocation3 + $0x30] sm:$0xff]
          %v1846 = vld [vmem:[#allocation3 + $0x38] sm:$0xff]
          %v1847 = vld [vmem:[#allocation3 + $0x40] sm:$0xff]
          %v1848 = vld [vmem:[#allocation3 + $0x48] sm:$0xff]
          %v1849 = vld [vmem:[#allocation3 + $0x50] sm:$0xff]
          %v1850 = vld [vmem:[#allocation3 + $0x58] sm:$0xff]
          %v1851 = vld [vmem:[#allocation3 + $0x60] sm:$0xff]
          %v1852 = vld [vmem:[#allocation3 + $0x68] sm:$0xff]
          %v1853 = vld [vmem:[#allocation3 + $0x70] sm:$0xff]
          %v1854 = vld [vmem:[#allocation3 + $0x78] sm:$0xff]
          %vm1855 = vcmask 64512
          %v1856 = vsel %vm1855, %v1774, 0.0
          %1857 = vadd.xlane.f32.xlu0 %v1856
          %v1858 = vpop.xlane.xlu0 %1857
          %v1859 = vsel %vm1855, %v1777, 0.0
          %1860 = vadd.xlane.f32.xlu0 %v1859
          %v1861 = vpop.xlane.xlu0 %1860
          %v1862 = vsel %vm1855, %v1782, 0.0
          %1863 = vadd.xlane.f32.xlu0 %v1862
          %v1864 = vpop.xlane.xlu0 %1863
          %v1865 = vsel %vm1855, %v1785, 0.0
          %1866 = vadd.xlane.f32.xlu0 %v1865
          %v1867 = vpop.xlane.xlu0 %1866
          %v1868 = vsel %vm1855, %v1790, 0.0
          %1869 = vadd.xlane.f32.xlu0 %v1868
          %v1870 = vpop.xlane.xlu0 %1869
          %v1871 = vsel %vm1855, %v1793, 0.0
          %1872 = vadd.xlane.f32.xlu0 %v1871
          %v1873 = vpop.xlane.xlu0 %1872
          %v1874 = vsel %vm1855, %v1798, 0.0
          %1875 = vadd.xlane.f32.xlu0 %v1874
          %v1876 = vpop.xlane.xlu0 %1875
          %v1877 = vsel %vm1855, %v1801, 0.0
          %1878 = vadd.xlane.f32.xlu0 %v1877
          %v1879 = vpop.xlane.xlu0 %1878
          %v1880 = vsel %vm1855, %v1806, 0.0
          %1881 = vadd.xlane.f32.xlu0 %v1880
          %v1882 = vpop.xlane.xlu0 %1881
          %v1883 = vsel %vm1855, %v1809, 0.0
          %1884 = vadd.xlane.f32.xlu0 %v1883
          %v1885 = vpop.xlane.xlu0 %1884
          %v1886 = vsel %vm1855, %v1814, 0.0
          %1887 = vadd.xlane.f32.xlu0 %v1886
          %v1888 = vpop.xlane.xlu0 %1887
          %v1889 = vsel %vm1855, %v1817, 0.0
          %1890 = vadd.xlane.f32.xlu0 %v1889
          %v1891 = vpop.xlane.xlu0 %1890
          %v1892 = vsel %vm1855, %v1822, 0.0
          %1893 = vadd.xlane.f32.xlu0 %v1892
          %v1894 = vpop.xlane.xlu0 %1893
          %v1895 = vsel %vm1855, %v1825, 0.0
          %1896 = vadd.xlane.f32.xlu0 %v1895
          %v1897 = vpop.xlane.xlu0 %1896
          %v1898 = vsel %vm1855, %v1830, 0.0
          %1899 = vadd.xlane.f32.xlu0 %v1898
          %v1900 = vpop.xlane.xlu0 %1899
          %v1901 = vsel %vm1855, %v1833, 0.0
          %1902 = vadd.xlane.f32.xlu0 %v1901
          %v1903 = vpop.xlane.xlu0 %1902
          %v1904 = vadd.f32 %v1839, %v1858
          %v1905 = vadd.f32 %v1840, %v1861
          %v1906 = vadd.f32 %v1841, %v1864
          %v1907 = vadd.f32 %v1842, %v1867
          %v1908 = vadd.f32 %v1843, %v1870
          %v1909 = vadd.f32 %v1844, %v1873
          %v1910 = vadd.f32 %v1845, %v1876
          %v1911 = vadd.f32 %v1846, %v1879
          %v1912 = vadd.f32 %v1847, %v1882
          %v1913 = vadd.f32 %v1848, %v1885
          %v1914 = vadd.f32 %v1849, %v1888
          %v1915 = vadd.f32 %v1850, %v1891
          %v1916 = vadd.f32 %v1851, %v1894
          %v1917 = vadd.f32 %v1852, %v1897
          %v1918 = vadd.f32 %v1853, %v1900
          %v1919 = vadd.f32 %v1854, %v1903
          %vm1920 = vcmask 7168
          %1921 = vst.msk [vmem:[#allocation3] sm:$0xff] %vm1920, %v1904
          %1922 = vst.msk [vmem:[#allocation3 + $0x8] sm:$0xff] %vm1920, %v1905
          %1923 = vst.msk [vmem:[#allocation3 + $0x10] sm:$0xff] %vm1920, %v1906
          %1924 = vst.msk [vmem:[#allocation3 + $0x18] sm:$0xff] %vm1920, %v1907
          %1925 = vst.msk [vmem:[#allocation3 + $0x20] sm:$0xff] %vm1920, %v1908
          %1926 = vst.msk [vmem:[#allocation3 + $0x28] sm:$0xff] %vm1920, %v1909
          %1927 = vst.msk [vmem:[#allocation3 + $0x30] sm:$0xff] %vm1920, %v1910
          %1928 = vst.msk [vmem:[#allocation3 + $0x38] sm:$0xff] %vm1920, %v1911
          %1929 = vst.msk [vmem:[#allocation3 + $0x40] sm:$0xff] %vm1920, %v1912
          %1930 = vst.msk [vmem:[#allocation3 + $0x48] sm:$0xff] %vm1920, %v1913
          %1931 = vst.msk [vmem:[#allocation3 + $0x50] sm:$0xff] %vm1920, %v1914
          %1932 = vst.msk [vmem:[#allocation3 + $0x58] sm:$0xff] %vm1920, %v1915
          %1933 = vst.msk [vmem:[#allocation3 + $0x60] sm:$0xff] %vm1920, %v1916
          %1934 = vst.msk [vmem:[#allocation3 + $0x68] sm:$0xff] %vm1920, %v1917
          %1935 = vst.msk [vmem:[#allocation3 + $0x70] sm:$0xff] %vm1920, %v1918
          %1936 = vst.msk [vmem:[#allocation3 + $0x78] sm:$0xff] %vm1920, %v1919
          %v1937 = vld [vmem:[#allocation3] sm:$0xff]
          %v1938 = vld [vmem:[#allocation3 + $0x8] sm:$0xff]
          %v1939 = vld [vmem:[#allocation3 + $0x10] sm:$0xff]
          %v1940 = vld [vmem:[#allocation3 + $0x18] sm:$0xff]
          %v1941 = vld [vmem:[#allocation3 + $0x20] sm:$0xff]
          %v1942 = vld [vmem:[#allocation3 + $0x28] sm:$0xff]
          %v1943 = vld [vmem:[#allocation3 + $0x30] sm:$0xff]
          %v1944 = vld [vmem:[#allocation3 + $0x38] sm:$0xff]
          %v1945 = vld [vmem:[#allocation3 + $0x40] sm:$0xff]
          %v1946 = vld [vmem:[#allocation3 + $0x48] sm:$0xff]
          %v1947 = vld [vmem:[#allocation3 + $0x50] sm:$0xff]
          %v1948 = vld [vmem:[#allocation3 + $0x58] sm:$0xff]
          %v1949 = vld [vmem:[#allocation3 + $0x60] sm:$0xff]
          %v1950 = vld [vmem:[#allocation3 + $0x68] sm:$0xff]
          %v1951 = vld [vmem:[#allocation3 + $0x70] sm:$0xff]
          %v1952 = vld [vmem:[#allocation3 + $0x78] sm:$0xff]
          %v1953 = vmul.f32 %v1774, %v1774
          %v1954 = vmul.f32 %v1777, %v1777
          %v1955 = vmul.f32 %v1782, %v1782
          %v1956 = vmul.f32 %v1785, %v1785
          %v1957 = vmul.f32 %v1790, %v1790
          %v1958 = vmul.f32 %v1793, %v1793
          %v1959 = vmul.f32 %v1798, %v1798
          %v1960 = vmul.f32 %v1801, %v1801
          %v1961 = vmul.f32 %v1806, %v1806
          %v1962 = vmul.f32 %v1809, %v1809
          %v1963 = vmul.f32 %v1814, %v1814
          %v1964 = vmul.f32 %v1817, %v1817
          %v1965 = vmul.f32 %v1822, %v1822
          %v1966 = vmul.f32 %v1825, %v1825
          %v1967 = vmul.f32 %v1830, %v1830
          %v1968 = vmul.f32 %v1833, %v1833
          %v1969 = vsel %vm1855, %v1953, 0.0
          %1970 = vadd.xlane.f32.xlu0 %v1969
          %v1971 = vpop.xlane.xlu0 %1970
          %v1972 = vsel %vm1855, %v1954, 0.0
          %1973 = vadd.xlane.f32.xlu0 %v1972
          %v1974 = vpop.xlane.xlu0 %1973
          %v1975 = vsel %vm1855, %v1955, 0.0
          %1976 = vadd.xlane.f32.xlu0 %v1975
          %v1977 = vpop.xlane.xlu0 %1976
          %v1978 = vsel %vm1855, %v1956, 0.0
          %1979 = vadd.xlane.f32.xlu0 %v1978
          %v1980 = vpop.xlane.xlu0 %1979
          %v1981 = vsel %vm1855, %v1957, 0.0
          %1982 = vadd.xlane.f32.xlu0 %v1981
          %v1983 = vpop.xlane.xlu0 %1982
          %v1984 = vsel %vm1855, %v1958, 0.0
          %1985 = vadd.xlane.f32.xlu0 %v1984
          %v1986 = vpop.xlane.xlu0 %1985
          %v1987 = vsel %vm1855, %v1959, 0.0
          %1988 = vadd.xlane.f32.xlu0 %v1987
          %v1989 = vpop.xlane.xlu0 %1988
          %v1990 = vsel %vm1855, %v1960, 0.0
          %1991 = vadd.xlane.f32.xlu0 %v1990
          %v1992 = vpop.xlane.xlu0 %1991
          %v1993 = vsel %vm1855, %v1961, 0.0
          %1994 = vadd.xlane.f32.xlu0 %v1993
          %v1995 = vpop.xlane.xlu0 %1994
          %v1996 = vsel %vm1855, %v1962, 0.0
          %1997 = vadd.xlane.f32.xlu0 %v1996
          %v1998 = vpop.xlane.xlu0 %1997
          %v1999 = vsel %vm1855, %v1963, 0.0
          %2000 = vadd.xlane.f32.xlu0 %v1999
          %v2001 = vpop.xlane.xlu0 %2000
          %v2002 = vsel %vm1855, %v1964, 0.0
          %2003 = vadd.xlane.f32.xlu0 %v2002
          %v2004 = vpop.xlane.xlu0 %2003
          %v2005 = vsel %vm1855, %v1965, 0.0
          %2006 = vadd.xlane.f32.xlu0 %v2005
          %v2007 = vpop.xlane.xlu0 %2006
          %v2008 = vsel %vm1855, %v1966, 0.0
          %2009 = vadd.xlane.f32.xlu0 %v2008
          %v2010 = vpop.xlane.xlu0 %2009
          %v2011 = vsel %vm1855, %v1967, 0.0
          %2012 = vadd.xlane.f32.xlu0 %v2011
          %v2013 = vpop.xlane.xlu0 %2012
          %v2014 = vsel %vm1855, %v1968, 0.0
          %2015 = vadd.xlane.f32.xlu0 %v2014
          %v2016 = vpop.xlane.xlu0 %2015
          %v2017 = vadd.f32 %v1937, %v1971
          %v2018 = vadd.f32 %v1938, %v1974
          %v2019 = vadd.f32 %v1939, %v1977
          %v2020 = vadd.f32 %v1940, %v1980
          %v2021 = vadd.f32 %v1941, %v1983
          %v2022 = vadd.f32 %v1942, %v1986
          %v2023 = vadd.f32 %v1943, %v1989
          %v2024 = vadd.f32 %v1944, %v1992
          %v2025 = vadd.f32 %v1945, %v1995
          %v2026 = vadd.f32 %v1946, %v1998
          %v2027 = vadd.f32 %v1947, %v2001
          %v2028 = vadd.f32 %v1948, %v2004
          %v2029 = vadd.f32 %v1949, %v2007
          %v2030 = vadd.f32 %v1950, %v2010
          %v2031 = vadd.f32 %v1951, %v2013
          %v2032 = vadd.f32 %v1952, %v2016
          %vm2033 = vcmask 15368
          %2034 = vst.msk [vmem:[#allocation3] sm:$0xff] %vm2033, %v2017
          %2035 = vst.msk [vmem:[#allocation3 + $0x8] sm:$0xff] %vm2033, %v2018
          %2036 = vst.msk [vmem:[#allocation3 + $0x10] sm:$0xff] %vm2033, %v2019
          %2037 = vst.msk [vmem:[#allocation3 + $0x18] sm:$0xff] %vm2033, %v2020
          %2038 = vst.msk [vmem:[#allocation3 + $0x20] sm:$0xff] %vm2033, %v2021
          %2039 = vst.msk [vmem:[#allocation3 + $0x28] sm:$0xff] %vm2033, %v2022
          %2040 = vst.msk [vmem:[#allocation3 + $0x30] sm:$0xff] %vm2033, %v2023
          %2041 = vst.msk [vmem:[#allocation3 + $0x38] sm:$0xff] %vm2033, %v2024
          %2042 = vst.msk [vmem:[#allocation3 + $0x40] sm:$0xff] %vm2033, %v2025
          %2043 = vst.msk [vmem:[#allocation3 + $0x48] sm:$0xff] %vm2033, %v2026
          %2044 = vst.msk [vmem:[#allocation3 + $0x50] sm:$0xff] %vm2033, %v2027
          %2045 = vst.msk [vmem:[#allocation3 + $0x58] sm:$0xff] %vm2033, %v2028
          %2046 = vst.msk [vmem:[#allocation3 + $0x60] sm:$0xff] %vm2033, %v2029
          %2047 = vst.msk [vmem:[#allocation3 + $0x68] sm:$0xff] %vm2033, %v2030
          %2048 = vst.msk [vmem:[#allocation3 + $0x70] sm:$0xff] %vm2033, %v2031
          %2049 = vst.msk [vmem:[#allocation3 + $0x78] sm:$0xff] %vm2033, %v2032
        $region68: #{generator_forward.1} parent=63 // pred_fallthru
          _
        %p2050 = pnand %p339, %p312
        %p2051 = pneg %p2050
        // Predicated region
        $region69: #{generator_forward.1} parent=63 // pred_check
          _
        $region70: #{generator_forward.1} parent=63 // pred_check_branch
          %2053 = sbr.rel (%p2050) target = $region72
        $region71: #{generator_forward.1} parent=63 // pred_region
          %v2054 = vld [vmem:[#allocation3] sm:$0xff]
          %v2055 = vld [vmem:[#allocation3 + $0x8] sm:$0xff]
          %v2056 = vld [vmem:[#allocation3 + $0x10] sm:$0xff]
          %v2057 = vld [vmem:[#allocation3 + $0x18] sm:$0xff]
          %v2058 = vld [vmem:[#allocation3 + $0x20] sm:$0xff]
          %v2059 = vld [vmem:[#allocation3 + $0x28] sm:$0xff]
          %v2060 = vld [vmem:[#allocation3 + $0x30] sm:$0xff]
          %v2061 = vld [vmem:[#allocation3 + $0x38] sm:$0xff]
          %v2062 = vld [vmem:[#allocation3 + $0x40] sm:$0xff]
          %v2063 = vld [vmem:[#allocation3 + $0x48] sm:$0xff]
          %v2064 = vld [vmem:[#allocation3 + $0x50] sm:$0xff]
          %v2065 = vld [vmem:[#allocation3 + $0x58] sm:$0xff]
          %v2066 = vld [vmem:[#allocation3 + $0x60] sm:$0xff]
          %v2067 = vld [vmem:[#allocation3 + $0x68] sm:$0xff]
          %v2068 = vld [vmem:[#allocation3 + $0x70] sm:$0xff]
          %v2069 = vld [vmem:[#allocation3 + $0x78] sm:$0xff]
          %v2070 = vmul.f32 %v2054, 0.0625
          %v2071 = vmul.f32 %v2055, 0.0625
          %v2072 = vmul.f32 %v2056, 0.0625
          %v2073 = vmul.f32 %v2057, 0.0625
          %v2074 = vmul.f32 %v2058, 0.0625
          %v2075 = vmul.f32 %v2059, 0.0625
          %v2076 = vmul.f32 %v2060, 0.0625
          %v2077 = vmul.f32 %v2061, 0.0625
          %v2078 = vmul.f32 %v2062, 0.0625
          %v2079 = vmul.f32 %v2063, 0.0625
          %v2080 = vmul.f32 %v2064, 0.0625
          %v2081 = vmul.f32 %v2065, 0.0625
          %v2082 = vmul.f32 %v2066, 0.0625
          %v2083 = vmul.f32 %v2067, 0.0625
          %v2084 = vmul.f32 %v2068, 0.0625
          %v2085 = vmul.f32 %v2069, 0.0625
          %v2086 = vmul.f32 %v2070, %v2070
          %v2087 = vmul.f32 %v2071, %v2071
          %v2088 = vmul.f32 %v2072, %v2072
          %v2089 = vmul.f32 %v2073, %v2073
          %v2090 = vmul.f32 %v2074, %v2074
          %v2091 = vmul.f32 %v2075, %v2075
          %v2092 = vmul.f32 %v2076, %v2076
          %v2093 = vmul.f32 %v2077, %v2077
          %v2094 = vmul.f32 %v2078, %v2078
          %v2095 = vmul.f32 %v2079, %v2079
          %v2096 = vmul.f32 %v2080, %v2080
          %v2097 = vmul.f32 %v2081, %v2081
          %v2098 = vmul.f32 %v2082, %v2082
          %v2099 = vmul.f32 %v2083, %v2083
          %v2100 = vmul.f32 %v2084, %v2084
          %v2101 = vmul.f32 %v2085, %v2085
          %2118 = vrot.lane.b32.xlu0 %v2086, 1
          %v2119 = vpop.permute.xlu0 %2118
          %2120 = vrot.lane.b32.xlu0 %v2087, 1
          %v2121 = vpop.permute.xlu0 %2120
          %2122 = vrot.lane.b32.xlu0 %v2088, 1
          %v2123 = vpop.permute.xlu0 %2122
          %2124 = vrot.lane.b32.xlu0 %v2089, 1
          %v2125 = vpop.permute.xlu0 %2124
          %2126 = vrot.lane.b32.xlu0 %v2090, 1
          %v2127 = vpop.permute.xlu0 %2126
          %2128 = vrot.lane.b32.xlu0 %v2091, 1
          %v2129 = vpop.permute.xlu0 %2128
          %2130 = vrot.lane.b32.xlu0 %v2092, 1
          %v2131 = vpop.permute.xlu0 %2130
          %2132 = vrot.lane.b32.xlu0 %v2093, 1
          %v2133 = vpop.permute.xlu0 %2132
          %2134 = vrot.lane.b32.xlu0 %v2094, 1
          %v2135 = vpop.permute.xlu0 %2134
          %2136 = vrot.lane.b32.xlu0 %v2095, 1
          %v2137 = vpop.permute.xlu0 %2136
          %2138 = vrot.lane.b32.xlu0 %v2096, 1
          %v2139 = vpop.permute.xlu0 %2138
          %2140 = vrot.lane.b32.xlu0 %v2097, 1
          %v2141 = vpop.permute.xlu0 %2140
          %2142 = vrot.lane.b32.xlu0 %v2098, 1
          %v2143 = vpop.permute.xlu0 %2142
          %2144 = vrot.lane.b32.xlu0 %v2099, 1
          %v2145 = vpop.permute.xlu0 %2144
          %2146 = vrot.lane.b32.xlu0 %v2100, 1
          %v2147 = vpop.permute.xlu0 %2146
          %2148 = vrot.lane.b32.xlu0 %v2101, 1
          %v2149 = vpop.permute.xlu0 %2148
          %v2166 = vsub.f32 %v2070, %v2119
          %v2167 = vsub.f32 %v2071, %v2121
          %v2168 = vsub.f32 %v2072, %v2123
          %v2169 = vsub.f32 %v2073, %v2125
          %v2170 = vsub.f32 %v2074, %v2127
          %v2171 = vsub.f32 %v2075, %v2129
          %v2172 = vsub.f32 %v2076, %v2131
          %v2173 = vsub.f32 %v2077, %v2133
          %v2174 = vsub.f32 %v2078, %v2135
          %v2175 = vsub.f32 %v2079, %v2137
          %v2176 = vsub.f32 %v2080, %v2139
          %v2177 = vsub.f32 %v2081, %v2141
          %v2178 = vsub.f32 %v2082, %v2143
          %v2179 = vsub.f32 %v2083, %v2145
          %v2180 = vsub.f32 %v2084, %v2147
          %v2181 = vsub.f32 %v2085, %v2149
          %v2182 = vld [vmem:[%s4] sm:$0xff]
          %v2183 = vld [vmem:[%s4 + $0x8] sm:$0xff]
          %v2184 = vld [vmem:[%s4 + $0x10] sm:$0xff]
          %v2185 = vld [vmem:[%s4 + $0x18] sm:$0xff]
          %v2186 = vld [vmem:[%s4 + $0x20] sm:$0xff]
          %v2187 = vld [vmem:[%s4 + $0x28] sm:$0xff]
          %v2188 = vld [vmem:[%s4 + $0x30] sm:$0xff]
          %v2189 = vld [vmem:[%s4 + $0x38] sm:$0xff]
          %v2190 = vld [vmem:[%s4 + $0x40] sm:$0xff]
          %v2191 = vld [vmem:[%s4 + $0x48] sm:$0xff]
          %v2192 = vld [vmem:[%s4 + $0x50] sm:$0xff]
          %v2193 = vld [vmem:[%s4 + $0x58] sm:$0xff]
          %v2194 = vld [vmem:[%s4 + $0x60] sm:$0xff]
          %v2195 = vld [vmem:[%s4 + $0x68] sm:$0xff]
          %v2196 = vld [vmem:[%s4 + $0x70] sm:$0xff]
          %v2197 = vld [vmem:[%s4 + $0x78] sm:$0xff]
          %v2198 = vadd.f32 %v2166, 1e-05
          %v2199 = vadd.f32 %v2167, 1e-05
          %v2200 = vadd.f32 %v2168, 1e-05
          %v2201 = vadd.f32 %v2169, 1e-05
          %v2202 = vadd.f32 %v2170, 1e-05
          %v2203 = vadd.f32 %v2171, 1e-05
          %v2204 = vadd.f32 %v2172, 1e-05
          %v2205 = vadd.f32 %v2173, 1e-05
          %v2206 = vadd.f32 %v2174, 1e-05
          %v2207 = vadd.f32 %v2175, 1e-05
          %v2208 = vadd.f32 %v2176, 1e-05
          %v2209 = vadd.f32 %v2177, 1e-05
          %v2210 = vadd.f32 %v2178, 1e-05
          %v2211 = vadd.f32 %v2179, 1e-05
          %v2212 = vadd.f32 %v2180, 1e-05
          %v2213 = vadd.f32 %v2181, 1e-05
          %v2214 = vrsqrt.pop %v2198
          %v2215 = vrsqrt.pop %v2199
          %v2216 = vrsqrt.pop %v2200
          %v2217 = vrsqrt.pop %v2201
          %v2218 = vrsqrt.pop %v2202
          %v2219 = vrsqrt.pop %v2203
          %v2220 = vrsqrt.pop %v2204
          %v2221 = vrsqrt.pop %v2205
          %v2222 = vrsqrt.pop %v2206
          %v2223 = vrsqrt.pop %v2207
          %v2224 = vrsqrt.pop %v2208
          %v2225 = vrsqrt.pop %v2209
          %v2226 = vrsqrt.pop %v2210
          %v2227 = vrsqrt.pop %v2211
          %v2228 = vrsqrt.pop %v2212
          %v2229 = vrsqrt.pop %v2213
          %2246 = vrot.lane.b32.xlu0 %v2214, 127
          %v2247 = vpop.permute.xlu0 %2246
          %2248 = vrot.lane.b32.xlu0 %v2215, 127
          %v2249 = vpop.permute.xlu0 %2248
          %2250 = vrot.lane.b32.xlu0 %v2216, 127
          %v2251 = vpop.permute.xlu0 %2250
          %2252 = vrot.lane.b32.xlu0 %v2217, 127
          %v2253 = vpop.permute.xlu0 %2252
          %2254 = vrot.lane.b32.xlu0 %v2218, 127
          %v2255 = vpop.permute.xlu0 %2254
          %2256 = vrot.lane.b32.xlu0 %v2219, 127
          %v2257 = vpop.permute.xlu0 %2256
          %2258 = vrot.lane.b32.xlu0 %v2220, 127
          %v2259 = vpop.permute.xlu0 %2258
          %2260 = vrot.lane.b32.xlu0 %v2221, 127
          %v2261 = vpop.permute.xlu0 %2260
          %2262 = vrot.lane.b32.xlu0 %v2222, 127
          %v2263 = vpop.permute.xlu0 %2262
          %2264 = vrot.lane.b32.xlu0 %v2223, 127
          %v2265 = vpop.permute.xlu0 %2264
          %2266 = vrot.lane.b32.xlu0 %v2224, 127
          %v2267 = vpop.permute.xlu0 %2266
          %2268 = vrot.lane.b32.xlu0 %v2225, 127
          %v2269 = vpop.permute.xlu0 %2268
          %2270 = vrot.lane.b32.xlu0 %v2226, 127
          %v2271 = vpop.permute.xlu0 %2270
          %2272 = vrot.lane.b32.xlu0 %v2227, 127
          %v2273 = vpop.permute.xlu0 %2272
          %2274 = vrot.lane.b32.xlu0 %v2228, 127
          %v2275 = vpop.permute.xlu0 %2274
          %2276 = vrot.lane.b32.xlu0 %v2229, 127
          %v2277 = vpop.permute.xlu0 %2276
          %v2294 = vmul.f32 %v2182, %v2247
          %v2295 = vmul.f32 %v2183, %v2249
          %v2296 = vmul.f32 %v2184, %v2251
          %v2297 = vmul.f32 %v2185, %v2253
          %v2298 = vmul.f32 %v2186, %v2255
          %v2299 = vmul.f32 %v2187, %v2257
          %v2300 = vmul.f32 %v2188, %v2259
          %v2301 = vmul.f32 %v2189, %v2261
          %v2302 = vmul.f32 %v2190, %v2263
          %v2303 = vmul.f32 %v2191, %v2265
          %v2304 = vmul.f32 %v2192, %v2267
          %v2305 = vmul.f32 %v2193, %v2269
          %v2306 = vmul.f32 %v2194, %v2271
          %v2307 = vmul.f32 %v2195, %v2273
          %v2308 = vmul.f32 %v2196, %v2275
          %v2309 = vmul.f32 %v2197, %v2277
          %vm2310 = vcmask 7168
          %2311 = vst.msk [vmem:[#allocation3] sm:$0xff] %vm2310, %v2294
          %2312 = vst.msk [vmem:[#allocation3 + $0x8] sm:$0xff] %vm2310, %v2295
          %2313 = vst.msk [vmem:[#allocation3 + $0x10] sm:$0xff] %vm2310, %v2296
          %2314 = vst.msk [vmem:[#allocation3 + $0x18] sm:$0xff] %vm2310, %v2297
          %2315 = vst.msk [vmem:[#allocation3 + $0x20] sm:$0xff] %vm2310, %v2298
          %2316 = vst.msk [vmem:[#allocation3 + $0x28] sm:$0xff] %vm2310, %v2299
          %2317 = vst.msk [vmem:[#allocation3 + $0x30] sm:$0xff] %vm2310, %v2300
          %2318 = vst.msk [vmem:[#allocation3 + $0x38] sm:$0xff] %vm2310, %v2301
          %2319 = vst.msk [vmem:[#allocation3 + $0x40] sm:$0xff] %vm2310, %v2302
          %2320 = vst.msk [vmem:[#allocation3 + $0x48] sm:$0xff] %vm2310, %v2303
          %2321 = vst.msk [vmem:[#allocation3 + $0x50] sm:$0xff] %vm2310, %v2304
          %2322 = vst.msk [vmem:[#allocation3 + $0x58] sm:$0xff] %vm2310, %v2305
          %2323 = vst.msk [vmem:[#allocation3 + $0x60] sm:$0xff] %vm2310, %v2306
          %2324 = vst.msk [vmem:[#allocation3 + $0x68] sm:$0xff] %vm2310, %v2307
          %2325 = vst.msk [vmem:[#allocation3 + $0x70] sm:$0xff] %vm2310, %v2308
          %2326 = vst.msk [vmem:[#allocation3 + $0x78] sm:$0xff] %vm2310, %v2309
          %v2327 = vld [vmem:[%s4] sm:$0xff]
          %v2328 = vld [vmem:[%s4 + $0x8] sm:$0xff]
          %v2329 = vld [vmem:[%s4 + $0x10] sm:$0xff]
          %v2330 = vld [vmem:[%s4 + $0x18] sm:$0xff]
          %v2331 = vld [vmem:[%s4 + $0x20] sm:$0xff]
          %v2332 = vld [vmem:[%s4 + $0x28] sm:$0xff]
          %v2333 = vld [vmem:[%s4 + $0x30] sm:$0xff]
          %v2334 = vld [vmem:[%s4 + $0x38] sm:$0xff]
          %v2335 = vld [vmem:[%s4 + $0x40] sm:$0xff]
          %v2336 = vld [vmem:[%s4 + $0x48] sm:$0xff]
          %v2337 = vld [vmem:[%s4 + $0x50] sm:$0xff]
          %v2338 = vld [vmem:[%s4 + $0x58] sm:$0xff]
          %v2339 = vld [vmem:[%s4 + $0x60] sm:$0xff]
          %v2340 = vld [vmem:[%s4 + $0x68] sm:$0xff]
          %v2341 = vld [vmem:[%s4 + $0x70] sm:$0xff]
          %v2342 = vld [vmem:[%s4 + $0x78] sm:$0xff]
          %v2343 = vmul.f32 %v2070, %v2294
          %v2344 = vmul.f32 %v2071, %v2295
          %v2345 = vmul.f32 %v2072, %v2296
          %v2346 = vmul.f32 %v2073, %v2297
          %v2347 = vmul.f32 %v2074, %v2298
          %v2348 = vmul.f32 %v2075, %v2299
          %v2349 = vmul.f32 %v2076, %v2300
          %v2350 = vmul.f32 %v2077, %v2301
          %v2351 = vmul.f32 %v2078, %v2302
          %v2352 = vmul.f32 %v2079, %v2303
          %v2353 = vmul.f32 %v2080, %v2304
          %v2354 = vmul.f32 %v2081, %v2305
          %v2355 = vmul.f32 %v2082, %v2306
          %v2356 = vmul.f32 %v2083, %v2307
          %v2357 = vmul.f32 %v2084, %v2308
          %v2358 = vmul.f32 %v2085, %v2309
          %2375 = vrot.lane.b32.xlu0 %v2343, 1
          %v2376 = vpop.permute.xlu0 %2375
          %2377 = vrot.lane.b32.xlu0 %v2344, 1
          %v2378 = vpop.permute.xlu0 %2377
          %2379 = vrot.lane.b32.xlu0 %v2345, 1
          %v2380 = vpop.permute.xlu0 %2379
          %2381 = vrot.lane.b32.xlu0 %v2346, 1
          %v2382 = vpop.permute.xlu0 %2381
          %2383 = vrot.lane.b32.xlu0 %v2347, 1
          %v2384 = vpop.permute.xlu0 %2383
          %2385 = vrot.lane.b32.xlu0 %v2348, 1
          %v2386 = vpop.permute.xlu0 %2385
          %2387 = vrot.lane.b32.xlu0 %v2349, 1
          %v2388 = vpop.permute.xlu0 %2387
          %2389 = vrot.lane.b32.xlu0 %v2350, 1
          %v2390 = vpop.permute.xlu0 %2389
          %2391 = vrot.lane.b32.xlu0 %v2351, 1
          %v2392 = vpop.permute.xlu0 %2391
          %2393 = vrot.lane.b32.xlu0 %v2352, 1
          %v2394 = vpop.permute.xlu0 %2393
          %2395 = vrot.lane.b32.xlu0 %v2353, 1
          %v2396 = vpop.permute.xlu0 %2395
          %2397 = vrot.lane.b32.xlu0 %v2354, 1
          %v2398 = vpop.permute.xlu0 %2397
          %2399 = vrot.lane.b32.xlu0 %v2355, 1
          %v2400 = vpop.permute.xlu0 %2399
          %2401 = vrot.lane.b32.xlu0 %v2356, 1
          %v2402 = vpop.permute.xlu0 %2401
          %2403 = vrot.lane.b32.xlu0 %v2357, 1
          %v2404 = vpop.permute.xlu0 %2403
          %2405 = vrot.lane.b32.xlu0 %v2358, 1
          %v2406 = vpop.permute.xlu0 %2405
          %v2423 = vsub.f32 %v2327, %v2376
          %v2424 = vsub.f32 %v2328, %v2378
          %v2425 = vsub.f32 %v2329, %v2380
          %v2426 = vsub.f32 %v2330, %v2382
          %v2427 = vsub.f32 %v2331, %v2384
          %v2428 = vsub.f32 %v2332, %v2386
          %v2429 = vsub.f32 %v2333, %v2388
          %v2430 = vsub.f32 %v2334, %v2390
          %v2431 = vsub.f32 %v2335, %v2392
          %v2432 = vsub.f32 %v2336, %v2394
          %v2433 = vsub.f32 %v2337, %v2396
          %v2434 = vsub.f32 %v2338, %v2398
          %v2435 = vsub.f32 %v2339, %v2400
          %v2436 = vsub.f32 %v2340, %v2402
          %v2437 = vsub.f32 %v2341, %v2404
          %v2438 = vsub.f32 %v2342, %v2406
          %vm2439 = vcmask 15368
          %2440 = vst.msk [vmem:[#allocation3] sm:$0xff] %vm2439, %v2423
          %2441 = vst.msk [vmem:[#allocation3 + $0x8] sm:$0xff] %vm2439, %v2424
          %2442 = vst.msk [vmem:[#allocation3 + $0x10] sm:$0xff] %vm2439, %v2425
          %2443 = vst.msk [vmem:[#allocation3 + $0x18] sm:$0xff] %vm2439, %v2426
          %2444 = vst.msk [vmem:[#allocation3 + $0x20] sm:$0xff] %vm2439, %v2427
          %2445 = vst.msk [vmem:[#allocation3 + $0x28] sm:$0xff] %vm2439, %v2428
          %2446 = vst.msk [vmem:[#allocation3 + $0x30] sm:$0xff] %vm2439, %v2429
          %2447 = vst.msk [vmem:[#allocation3 + $0x38] sm:$0xff] %vm2439, %v2430
          %2448 = vst.msk [vmem:[#allocation3 + $0x40] sm:$0xff] %vm2439, %v2431
          %2449 = vst.msk [vmem:[#allocation3 + $0x48] sm:$0xff] %vm2439, %v2432
          %2450 = vst.msk [vmem:[#allocation3 + $0x50] sm:$0xff] %vm2439, %v2433
          %2451 = vst.msk [vmem:[#allocation3 + $0x58] sm:$0xff] %vm2439, %v2434
          %2452 = vst.msk [vmem:[#allocation3 + $0x60] sm:$0xff] %vm2439, %v2435
          %2453 = vst.msk [vmem:[#allocation3 + $0x68] sm:$0xff] %vm2439, %v2436
          %2454 = vst.msk [vmem:[#allocation3 + $0x70] sm:$0xff] %vm2439, %v2437
          %2455 = vst.msk [vmem:[#allocation3 + $0x78] sm:$0xff] %vm2439, %v2438
        $region72: #{generator_forward.1} parent=63 // pred_fallthru
          _
        %p2456 = scmp.eq.s32.totalorder %s22, 2
        // Predicated region
        $region73: #{generator_forward.1} parent=63 // pred_check
          %p2457 = pneg %p2456
        $region74: #{generator_forward.1} parent=63 // pred_check_branch
          %2459 = sbr.rel (%p2457) target = $region76
        $region75: #{generator_forward.1} parent=63 // pred_region
          %v2460 = vld [vmem:[#allocation3] sm:$0xff]
          %v2461 = vld [vmem:[#allocation3 + $0x8] sm:$0xff]
          %v2462 = vld [vmem:[#allocation3 + $0x10] sm:$0xff]
          %v2463 = vld [vmem:[#allocation3 + $0x18] sm:$0xff]
          %v2464 = vld [vmem:[#allocation3 + $0x20] sm:$0xff]
          %v2465 = vld [vmem:[#allocation3 + $0x28] sm:$0xff]
          %v2466 = vld [vmem:[#allocation3 + $0x30] sm:$0xff]
          %v2467 = vld [vmem:[#allocation3 + $0x38] sm:$0xff]
          %v2468 = vld [vmem:[#allocation3 + $0x40] sm:$0xff]
          %v2469 = vld [vmem:[#allocation3 + $0x48] sm:$0xff]
          %v2470 = vld [vmem:[#allocation3 + $0x50] sm:$0xff]
          %v2471 = vld [vmem:[#allocation3 + $0x58] sm:$0xff]
          %v2472 = vld [vmem:[#allocation3 + $0x60] sm:$0xff]
          %v2473 = vld [vmem:[#allocation3 + $0x68] sm:$0xff]
          %v2474 = vld [vmem:[#allocation3 + $0x70] sm:$0xff]
          %v2475 = vld [vmem:[#allocation3 + $0x78] sm:$0xff]
          %2477 = vset.pattern.permute.xlu0 0
          %2478 = vperm.xlu0 %2477, %v2460
          %v2479 = vpop.permute.xlu0 %2478
          %2482 = vset.pattern.permute.xlu0 0
          %2483 = vperm.xlu0 %2482, %v2461
          %v2484 = vpop.permute.xlu0 %2483
          %2487 = vset.pattern.permute.xlu0 0
          %2488 = vperm.xlu0 %2487, %v2462
          %v2489 = vpop.permute.xlu0 %2488
          %2492 = vset.pattern.permute.xlu0 0
          %2493 = vperm.xlu0 %2492, %v2463
          %v2494 = vpop.permute.xlu0 %2493
          %2497 = vset.pattern.permute.xlu0 0
          %2498 = vperm.xlu0 %2497, %v2464
          %v2499 = vpop.permute.xlu0 %2498
          %2502 = vset.pattern.permute.xlu0 0
          %2503 = vperm.xlu0 %2502, %v2465
          %v2504 = vpop.permute.xlu0 %2503
          %2507 = vset.pattern.permute.xlu0 0
          %2508 = vperm.xlu0 %2507, %v2466
          %v2509 = vpop.permute.xlu0 %2508
          %2512 = vset.pattern.permute.xlu0 0
          %2513 = vperm.xlu0 %2512, %v2467
          %v2514 = vpop.permute.xlu0 %2513
          %2517 = vset.pattern.permute.xlu0 0
          %2518 = vperm.xlu0 %2517, %v2468
          %v2519 = vpop.permute.xlu0 %2518
          %2522 = vset.pattern.permute.xlu0 0
          %2523 = vperm.xlu0 %2522, %v2469
          %v2524 = vpop.permute.xlu0 %2523
          %2527 = vset.pattern.permute.xlu0 0
          %2528 = vperm.xlu0 %2527, %v2470
          %v2529 = vpop.permute.xlu0 %2528
          %2532 = vset.pattern.permute.xlu0 0
          %2533 = vperm.xlu0 %2532, %v2471
          %v2534 = vpop.permute.xlu0 %2533
          %2537 = vset.pattern.permute.xlu0 0
          %2538 = vperm.xlu0 %2537, %v2472
          %v2539 = vpop.permute.xlu0 %2538
          %2542 = vset.pattern.permute.xlu0 0
          %2543 = vperm.xlu0 %2542, %v2473
          %v2544 = vpop.permute.xlu0 %2543
          %2547 = vset.pattern.permute.xlu0 0
          %2548 = vperm.xlu0 %2547, %v2474
          %v2549 = vpop.permute.xlu0 %2548
          %2552 = vset.pattern.permute.xlu0 0
          %2553 = vperm.xlu0 %2552, %v2475
          %v2554 = vpop.permute.xlu0 %2553
          %v2556 = vmul.f32 %v1774, %v2479
          %v2557 = vmul.f32 %v1777, %v2484
          %v2558 = vmul.f32 %v1782, %v2489
          %v2559 = vmul.f32 %v1785, %v2494
          %v2560 = vmul.f32 %v1790, %v2499
          %v2561 = vmul.f32 %v1793, %v2504
          %v2562 = vmul.f32 %v1798, %v2509
          %v2563 = vmul.f32 %v1801, %v2514
          %v2564 = vmul.f32 %v1806, %v2519
          %v2565 = vmul.f32 %v1809, %v2524
          %v2566 = vmul.f32 %v1814, %v2529
          %v2567 = vmul.f32 %v1817, %v2534
          %v2568 = vmul.f32 %v1822, %v2539
          %v2569 = vmul.f32 %v1825, %v2544
          %v2570 = vmul.f32 %v1830, %v2549
          %v2571 = vmul.f32 %v1833, %v2554
          %2572 = vset.pattern.permute.xlu0 1
          %2573 = vperm.xlu0 %2572, %v2460
          %v2574 = vpop.permute.xlu0 %2573
          %2576 = vset.pattern.permute.xlu0 1
          %2577 = vperm.xlu0 %2576, %v2461
          %v2578 = vpop.permute.xlu0 %2577
          %2580 = vset.pattern.permute.xlu0 1
          %2581 = vperm.xlu0 %2580, %v2462
          %v2582 = vpop.permute.xlu0 %2581
          %2584 = vset.pattern.permute.xlu0 1
          %2585 = vperm.xlu0 %2584, %v2463
          %v2586 = vpop.permute.xlu0 %2585
          %2588 = vset.pattern.permute.xlu0 1
          %2589 = vperm.xlu0 %2588, %v2464
          %v2590 = vpop.permute.xlu0 %2589
          %2592 = vset.pattern.permute.xlu0 1
          %2593 = vperm.xlu0 %2592, %v2465
          %v2594 = vpop.permute.xlu0 %2593
          %2596 = vset.pattern.permute.xlu0 1
          %2597 = vperm.xlu0 %2596, %v2466
          %v2598 = vpop.permute.xlu0 %2597
          %2600 = vset.pattern.permute.xlu0 1
          %2601 = vperm.xlu0 %2600, %v2467
          %v2602 = vpop.permute.xlu0 %2601
          %2604 = vset.pattern.permute.xlu0 1
          %2605 = vperm.xlu0 %2604, %v2468
          %v2606 = vpop.permute.xlu0 %2605
          %2608 = vset.pattern.permute.xlu0 1
          %2609 = vperm.xlu0 %2608, %v2469
          %v2610 = vpop.permute.xlu0 %2609
          %2612 = vset.pattern.permute.xlu0 1
          %2613 = vperm.xlu0 %2612, %v2470
          %v2614 = vpop.permute.xlu0 %2613
          %2616 = vset.pattern.permute.xlu0 1
          %2617 = vperm.xlu0 %2616, %v2471
          %v2618 = vpop.permute.xlu0 %2617
          %2620 = vset.pattern.permute.xlu0 1
          %2621 = vperm.xlu0 %2620, %v2472
          %v2622 = vpop.permute.xlu0 %2621
          %2624 = vset.pattern.permute.xlu0 1
          %2625 = vperm.xlu0 %2624, %v2473
          %v2626 = vpop.permute.xlu0 %2625
          %2628 = vset.pattern.permute.xlu0 1
          %2629 = vperm.xlu0 %2628, %v2474
          %v2630 = vpop.permute.xlu0 %2629
          %2632 = vset.pattern.permute.xlu0 1
          %2633 = vperm.xlu0 %2632, %v2475
          %v2634 = vpop.permute.xlu0 %2633
          %v2636 = vadd.f32 %v2556, %v2574
          %v2637 = vadd.f32 %v2557, %v2578
          %v2638 = vadd.f32 %v2558, %v2582
          %v2639 = vadd.f32 %v2559, %v2586
          %v2640 = vadd.f32 %v2560, %v2590
          %v2641 = vadd.f32 %v2561, %v2594
          %v2642 = vadd.f32 %v2562, %v2598
          %v2643 = vadd.f32 %v2563, %v2602
          %v2644 = vadd.f32 %v2564, %v2606
          %v2645 = vadd.f32 %v2565, %v2610
          %v2646 = vadd.f32 %v2566, %v2614
          %v2647 = vadd.f32 %v2567, %v2618
          %v2648 = vadd.f32 %v2568, %v2622
          %v2649 = vadd.f32 %v2569, %v2626
          %v2650 = vadd.f32 %v2570, %v2630
          %v2651 = vadd.f32 %v2571, %v2634
          %v2652 = vmax.f32 %v2636, 0.0
          %v2653 = vmax.f32 %v2637, 0.0
          %v2654 = vmax.f32 %v2638, 0.0
          %v2655 = vmax.f32 %v2639, 0.0
          %v2656 = vmax.f32 %v2640, 0.0
          %v2657 = vmax.f32 %v2641, 0.0
          %v2658 = vmax.f32 %v2642, 0.0
          %v2659 = vmax.f32 %v2643, 0.0
          %v2660 = vmax.f32 %v2644, 0.0
          %v2661 = vmax.f32 %v2645, 0.0
          %v2662 = vmax.f32 %v2646, 0.0
          %v2663 = vmax.f32 %v2647, 0.0
          %v2664 = vmax.f32 %v2648, 0.0
          %v2665 = vmax.f32 %v2649, 0.0
          %v2666 = vmax.f32 %v2650, 0.0
          %v2667 = vmax.f32 %v2651, 0.0
          %v2668 = vld [vmem:[%s5] sm:$0xf]
          %v2669 = vld [vmem:[%s5 + $0x4] sm:$0xf]
          %v2670 = vld [vmem:[%s5 + $0x8] sm:$0xf]
          %v2671 = vld [vmem:[%s5 + $0xc] sm:$0xf]
          %v2672 = vld [vmem:[%s5 + $0x10] sm:$0xf]
          %v2673 = vld [vmem:[%s5 + $0x14] sm:$0xf]
          %v2674 = vld [vmem:[%s5 + $0x18] sm:$0xf]
          %v2675 = vld [vmem:[%s5 + $0x1c] sm:$0xf]
          %v2676 = vld [vmem:[%s5 + $0x20] sm:$0xf]
          %v2677 = vld [vmem:[%s5 + $0x24] sm:$0xf]
          %v2678 = vld [vmem:[%s5 + $0x28] sm:$0xf]
          %v2679 = vld [vmem:[%s5 + $0x2c] sm:$0xf]
          %v2680 = vld [vmem:[%s5 + $0x30] sm:$0xf]
          %v2681 = vld [vmem:[%s5 + $0x34] sm:$0xf]
          %v2682 = vld [vmem:[%s5 + $0x38] sm:$0xf]
          %v2683 = vld [vmem:[%s5 + $0x3c] sm:$0xf]
          %v2684 = vld [vmem:[%s5 + $0x40] sm:$0xf]
          %v2685 = vld [vmem:[%s5 + $0x44] sm:$0xf]
          %v2686 = vld [vmem:[%s5 + $0x48] sm:$0xf]
          %v2687 = vld [vmem:[%s5 + $0x4c] sm:$0xf]
          %v2688 = vpack.c.bf16 %v2653, %v2652
          %v2689 = vpack.c.bf16 %v2655, %v2654
          %v2690 = vpack.c.bf16 %v2657, %v2656
          %v2691 = vpack.c.bf16 %v2659, %v2658
          %v2692 = vpack.c.bf16 %v2661, %v2660
          %v2693 = vpack.c.bf16 %v2663, %v2662
          %v2694 = vpack.c.bf16 %v2665, %v2664
          %v2695 = vpack.c.bf16 %v2667, %v2666
          %v2716 = vunpack.c.l.b16 %v2668
          %v2717 = vunpack.c.l.b16 %v2669
          %v2718 = vunpack.c.l.b16 %v2670
          %v2719 = vunpack.c.l.b16 %v2671
          %v2720 = vunpack.c.l.b16 %v2672
          %v2721 = vunpack.c.l.b16 %v2673
          %v2722 = vunpack.c.l.b16 %v2674
          %v2723 = vunpack.c.l.b16 %v2675
          %v2724 = vunpack.c.l.b16 %v2676
          %v2725 = vunpack.c.l.b16 %v2677
          %v2726 = vunpack.c.l.b16 %v2678
          %v2727 = vunpack.c.l.b16 %v2679
          %v2728 = vunpack.c.l.b16 %v2680
          %v2729 = vunpack.c.l.b16 %v2681
          %v2730 = vunpack.c.l.b16 %v2682
          %v2731 = vunpack.c.l.b16 %v2683
          %v2732 = vunpack.c.l.b16 %v2684
          %v2733 = vunpack.c.l.b16 %v2685
          %v2734 = vunpack.c.l.b16 %v2686
          %v2735 = vunpack.c.l.b16 %v2687
          %v2736 = vpack.c.b16 %v2717, %v2716
          %v2737 = vpack.c.b16 %v2719, %v2718
          %v2738 = vpack.c.b16 %v2721, %v2720
          %v2739 = vpack.c.b16 %v2723, %v2722
          %v2740 = vpack.c.b16 %v2725, %v2724
          %v2741 = vpack.c.b16 %v2727, %v2726
          %v2742 = vpack.c.b16 %v2729, %v2728
          %v2743 = vpack.c.b16 %v2731, %v2730
          %v2744 = vpack.c.b16 %v2733, %v2732
          %v2745 = vpack.c.b16 %v2735, %v2734
          %2756 = vmatprep.subr.bf16.mxu0 0
          %2757 = vmatpush1.bf16.msra.mxu0 %v2695
          %2758 = vmatprep.subr.bf16.mxu0 0
          %2759 = vmatpush1.bf16.msra.mxu0 %v2694
          %2760 = vmatprep.subr.bf16.mxu0 0
          %2761 = vmatpush1.bf16.msra.mxu0 %v2693
          %2762 = vmatprep.subr.bf16.mxu0 0
          %2763 = vmatpush1.bf16.msra.mxu0 %v2692
          %2764 = vmatprep.subr.bf16.mxu0 0
          %2765 = vmatpush1.bf16.msra.mxu0 %v2691
          %2766 = vmatprep.subr.bf16.mxu0 0
          %2767 = vmatpush1.bf16.msra.mxu0 %v2690
          %2768 = vmatprep.subr.bf16.mxu0 0
          %2769 = vmatpush1.bf16.msra.mxu0 %v2689
          %2770 = vmatprep.subr.bf16.mxu0 0
          %2771 = vmatpush1.bf16.msra.mxu0 %v2688
          %2772 = vmatprep.subr.bf16.mxu0 0
          %2773 = vmatpush2.bf16.msra.mxu0 0
          %2774 = vmatprep.subr.bf16.mxu0 0
          %2775 = vmatpush2.bf16.msra.mxu0 0
          %2776 = vmatprep.subr.bf16.mxu0 0
          %2777 = vmatpush2.bf16.msra.mxu0 0
          %2778 = vmatprep.subr.bf16.mxu0 0
          %2779 = vmatpush2.bf16.msra.mxu0 0
          %2780 = vmatprep.subr.bf16.mxu0 0
          %2781 = vmatpush2.bf16.msra.mxu0 0
          %2782 = vmatprep.subr.bf16.mxu0 0
          %2783 = vmatpush2.bf16.msra.mxu0 0
          %2784 = vmatprep.subr.bf16.mxu0 0
          %2785 = vmatpush2.bf16.msra.mxu0 0
          %2786 = vmatprep.subr.bf16.mxu0 0
          %2787 = vmatpush2.bf16.msra.mxu0 0
          %2788 = vmatprep.mubr.bf16.mxu0 0
          %2789 = vmatmul.mubr.bf16.gmra.mxu0 %v2736
          %v2790 = vpop.f32.mrf.mxu0
          %v2791 = vadd.f32 0.0, %v2790
          %v2792 = vpop.f32.mrf.mxu0
          %v2793 = vpop.f32.mrf.mxu0
          %v2794 = vadd.f32 0.0, %v2793
          %v2795 = vpop.f32.mrf.mxu0
          %2796 = vmatprep.mubr.bf16.mxu0 0
          %2797 = vmatmul.mubr.bf16.gmra.mxu0 %v2737
          %v2798 = vpop.f32.mrf.mxu0
          %v2799 = vadd.f32 0.0, %v2798
          %v2800 = vpop.f32.mrf.mxu0
          %v2801 = vpop.f32.mrf.mxu0
          %v2802 = vadd.f32 0.0, %v2801
          %v2803 = vpop.f32.mrf.mxu0
          %2804 = vmatprep.mubr.bf16.mxu0 0
          %2805 = vmatmul.mubr.bf16.gmra.mxu0 %v2738
          %v2806 = vpop.f32.mrf.mxu0
          %v2807 = vadd.f32 0.0, %v2806
          %v2808 = vpop.f32.mrf.mxu0
          %v2809 = vpop.f32.mrf.mxu0
          %v2810 = vadd.f32 0.0, %v2809
          %v2811 = vpop.f32.mrf.mxu0
          %2812 = vmatprep.mubr.bf16.mxu0 0
          %2813 = vmatmul.mubr.bf16.gmra.mxu0 %v2739
          %v2814 = vpop.f32.mrf.mxu0
          %v2815 = vadd.f32 0.0, %v2814
          %v2816 = vpop.f32.mrf.mxu0
          %v2817 = vpop.f32.mrf.mxu0
          %v2818 = vadd.f32 0.0, %v2817
          %v2819 = vpop.f32.mrf.mxu0
          %2820 = vmatprep.mubr.bf16.mxu0 0
          %2821 = vmatmul.mubr.bf16.gmra.mxu0 %v2740
          %v2822 = vpop.f32.mrf.mxu0
          %v2823 = vadd.f32 0.0, %v2822
          %v2824 = vpop.f32.mrf.mxu0
          %v2825 = vpop.f32.mrf.mxu0
          %v2826 = vadd.f32 0.0, %v2825
          %v2827 = vpop.f32.mrf.mxu0
          %2828 = vmatprep.mubr.bf16.mxu0 0
          %2829 = vmatmul.mubr.bf16.gmra.mxu0 %v2741
          %v2830 = vpop.f32.mrf.mxu0
          %v2831 = vadd.f32 0.0, %v2830
          %v2832 = vpop.f32.mrf.mxu0
          %v2833 = vpop.f32.mrf.mxu0
          %v2834 = vadd.f32 0.0, %v2833
          %v2835 = vpop.f32.mrf.mxu0
          %2836 = vmatprep.mubr.bf16.mxu0 0
          %2837 = vmatmul.mubr.bf16.gmra.mxu0 %v2742
          %v2838 = vpop.f32.mrf.mxu0
          %v2839 = vadd.f32 0.0, %v2838
          %v2840 = vpop.f32.mrf.mxu0
          %v2841 = vpop.f32.mrf.mxu0
          %v2842 = vadd.f32 0.0, %v2841
          %v2843 = vpop.f32.mrf.mxu0
          %2844 = vmatprep.mubr.bf16.mxu0 0
          %2845 = vmatmul.mubr.bf16.gmra.mxu0 %v2743
          %v2846 = vpop.f32.mrf.mxu0
          %v2847 = vadd.f32 0.0, %v2846
          %v2848 = vpop.f32.mrf.mxu0
          %v2849 = vpop.f32.mrf.mxu0
          %v2850 = vadd.f32 0.0, %v2849
          %v2851 = vpop.f32.mrf.mxu0
          %2852 = vmatprep.mubr.bf16.mxu0 0
          %2853 = vmatmul.mubr.bf16.gmra.mxu0 %v2744
          %v2854 = vpop.f32.mrf.mxu0
          %v2855 = vadd.f32 0.0, %v2854
          %v2856 = vpop.f32.mrf.mxu0
          %v2857 = vpop.f32.mrf.mxu0
          %v2858 = vadd.f32 0.0, %v2857
          %v2859 = vpop.f32.mrf.mxu0
          %2860 = vmatprep.mubr.bf16.mxu0 0
          %2861 = vmatmul.mubr.bf16.gmra.mxu0 %v2745
          %v2862 = vpop.f32.mrf.mxu0
          %v2863 = vadd.f32 0.0, %v2862
          %v2864 = vpop.f32.mrf.mxu0
          %v2865 = vpop.f32.mrf.mxu0
          %v2866 = vadd.f32 0.0, %v2865
          %v2867 = vpop.f32.mrf.mxu0
          %2868 = vdwg.mxu0
          %v2869 = vtanh.pop %v2791
          %v2870 = vtanh.pop %v2794
          %v2871 = vtanh.pop %v2799
          %v2872 = vtanh.pop %v2802
          %v2873 = vtanh.pop %v2807
          %v2874 = vtanh.pop %v2810
          %v2875 = vtanh.pop %v2815
          %v2876 = vtanh.pop %v2818
          %v2877 = vtanh.pop %v2823
          %v2878 = vtanh.pop %v2826
          %v2879 = vtanh.pop %v2831
          %v2880 = vtanh.pop %v2834
          %v2881 = vtanh.pop %v2839
          %v2882 = vtanh.pop %v2842
          %v2883 = vtanh.pop %v2847
          %v2884 = vtanh.pop %v2850
          %v2885 = vtanh.pop %v2855
          %v2886 = vtanh.pop %v2858
          %v2887 = vtanh.pop %v2863
          %v2888 = vtanh.pop %v2866
          %vm2889 = vcmask 64512
          %2890 = vst.msk [vmem:[%s301] sm:$0xff] %vm2889, %v2869
          %2891 = vst.msk [vmem:[%s301 + $0x8] sm:$0xff] %vm2889, %v2870
          %2892 = vst.msk [vmem:[%s301 + $0x10] sm:$0xff] %vm2889, %v2871
          %2893 = vst.msk [vmem:[%s301 + $0x18] sm:$0xff] %vm2889, %v2872
          %2894 = vst.msk [vmem:[%s301 + $0x20] sm:$0xff] %vm2889, %v2873
          %2895 = vst.msk [vmem:[%s301 + $0x28] sm:$0xff] %vm2889, %v2874
          %2896 = vst.msk [vmem:[%s301 + $0x30] sm:$0xff] %vm2889, %v2875
          %2897 = vst.msk [vmem:[%s301 + $0x38] sm:$0xff] %vm2889, %v2876
          %2898 = vst.msk [vmem:[%s301 + $0x40] sm:$0xff] %vm2889, %v2877
          %2899 = vst.msk [vmem:[%s301 + $0x48] sm:$0xff] %vm2889, %v2878
          %2900 = vst.msk [vmem:[%s301 + $0x50] sm:$0xff] %vm2889, %v2879
          %2901 = vst.msk [vmem:[%s301 + $0x58] sm:$0xff] %vm2889, %v2880
          %2902 = vst.msk [vmem:[%s301 + $0x60] sm:$0xff] %vm2889, %v2881
          %2903 = vst.msk [vmem:[%s301 + $0x68] sm:$0xff] %vm2889, %v2882
          %2904 = vst.msk [vmem:[%s301 + $0x70] sm:$0xff] %vm2889, %v2883
          %2905 = vst.msk [vmem:[%s301 + $0x78] sm:$0xff] %vm2889, %v2884
          %2906 = vst.msk [vmem:[%s301 + $0x80] sm:$0xff] %vm2889, %v2885
          %2907 = vst.msk [vmem:[%s301 + $0x88] sm:$0xff] %vm2889, %v2886
          %2908 = vst.msk [vmem:[%s301 + $0x90] sm:$0xff] %vm2889, %v2887
          %2909 = vst.msk [vmem:[%s301 + $0x98] sm:$0xff] %vm2889, %v2888
        $region76: #{generator_forward.1} parent=63 // pred_fallthru
          _
      $region64: #{generator_forward.1} parent=43 // pred_fallthru
        _
      %p2910 = scmp.eq.s32.totalorder %s22, 2
      %s2911 = scalar_select %p2910, %s23, 0
      %s2912 = scalar_select %p2910, %s24, 0
      %p2913 = scmp.lt.s32.totalorder %s2911, 1
      %s2914 = scalar_select %p2913, %s2911, 1
      %p2915 = scmp.lt.s32.totalorder %s2912, 0
      %s2916 = scalar_select %p2915, %s2912, 0
      %s2917 = smul.addr %s2914, 20
      %s2918 = sadd.s32 %s2916, %s2917
      %s2919 = smul.addr %s2918, 8
      %s2920 = scalar_lea.vmem %s6, %s2919
      // Predicated region
      $region77: #{generator_forward.1} parent=43 // pred_check
        %p2921 = pneg %p195
      $region78: #{generator_forward.1} parent=43 // pred_check_branch
        %2923 = sbr.rel (%p2921) target = $region80
      $region79: #{generator_forward.1} parent=43 // pred_region
        %p2924 = scmp.eq.s32.totalorder %s22, 2
        %s2925 = scalar_select %p2924, %s23, 0
        %s2926 = scalar_select %p2924, %s24, 0
      $region80: #{generator_forward.1} parent=43 // pred_fallthru
        _
    $region44: #{generator_forward.1} parent=5 // pred_fallthru
      _
    %p2927 = scmp.le.s32.totalorder 2, %s12
    // Predicated region
    $region81: #{generator_forward.1} parent=5 // pred_check
      %p2928 = pneg %p2927
    $region82: #{generator_forward.1} parent=5 // pred_check_branch
      %2930 = sbr.rel (%p2928) target = $region84
    $region83: #{generator_forward.1} parent=5 // pred_region
      %s2931 = ssub.s32 %s12, 2
      // Predicated region
      $region85: #{generator_forward.1} parent=83 // pred_check
        %p2932 = pneg %p201
      $region86: #{generator_forward.1} parent=83 // pred_check_branch
        %2934 = sbr.rel (%p2932) target = $region88
      $region87: #{generator_forward.1} parent=83 // pred_region
        %p2935 = scmp.eq.s32.totalorder %s25, 2
        %s2936 = scalar_select %p2935, %s26, 0
        %s2937 = scalar_select %p2935, %s27, 0
        %p2938 = scmp.lt.s32.totalorder %s2936, 1
        %s2939 = scalar_select %p2938, %s2936, 1
        %p2940 = scmp.lt.s32.totalorder %s2937, 0
        %s2941 = scalar_select %p2940, %s2937, 0
        %s2942 = smul.addr %s2939, 20
        %s2943 = sadd.s32 %s2941, %s2942
        %s2944 = smul.addr %s2943, 8
        %s2945 = scalar_lea.vmem %s6, %s2944
      $region88: #{generator_forward.1} parent=83 // pred_fallthru
        _
    $region84: #{generator_forward.1} parent=5 // pred_fallthru
      _
  $region6: #{generator_forward.1} parent=0 // loop_footer
    %s16 = sadd.s32 1, %s12
  $region7: #{generator_forward.1} parent=0 // loop_footer_branch
    %11 = sbr.rel target = $region3
  $region8: #{generator_forward.1} parent=0 // loop_exit
    _

</llo_original>
